<compile_context>
chip_gen: v7x
topology: tpu7x:2x2x1
jax: 0.10.0
libtpu: 0.0.40
codegen_flags: <defaults>
</compile_context>

<pallas_src>
import functools

import jax
import jax.numpy as jnp
from jax import lax
from jax.experimental import pallas as pl
from jax.experimental.pallas import tpu as pltpu

IN_SIZE = 10
MID_SIZE = 5
HIDDEN = 10
OUT_SIZE = 1
LANE = 128      # lane-dense (unmasked) output width
SUBLANE = 8     # batch is padded up to a multiple of this


def rnn_net_kernel(x_ref, w1t_ref, b1_ref, wiht_ref, whht_ref,
                   bih_ref, bhh_ref, w2p_ref, b2p_ref, o_ref, *, S, Bp):
    """Whole forward pass; operands resident in VMEM, recurrence in vregs.

    x_ref  : (S*Bp, IN)    time-major input, batch padded to Bp (multiple of 8)
    w*t_*  : weights pre-transposed in the wrapper (no in-kernel .T)
    w2p/b2p: lc2 weight/bias padded out to LANE columns -> lane-dense store
    o_ref  : (S*Bp, LANE)  column 0 holds the real output
    """
    H = HIDDEN

    # ---- lc1 + ReLU over all timesteps in a single MXU pass ----
    h1 = jnp.maximum(
        jnp.dot(x_ref[...], w1t_ref[...], preferred_element_type=jnp.float32)
        + b1_ref[...], 0.0)                                   # (S*Bp, MID)

    # ---- GRU input-side projections for all timesteps at once ----
    gx = jnp.dot(h1, wiht_ref[...], preferred_element_type=jnp.float32) \
        + bih_ref[...]                                        # (S*Bp, 3H)

    # Recurrent weights/bias loaded once, held in vregs for the whole loop.
    whh_t = whht_ref[...]                                     # (H, 3H)
    bhh = bhh_ref[...]                                        # (1, 3H)

    # ---- recurrence: fully unrolled, hidden state carried in vregs ----
    h = jnp.zeros((Bp, H), jnp.float32)
    hs = []
    for t in range(S):                          # S is compile-time static
        gx_t = gx[t * Bp:(t + 1) * Bp, :]       # sublane-aligned static slice
        gh = jnp.dot(h, whh_t, preferred_element_type=jnp.float32) + bhh
        # PyTorch GRU gate order: [r | z | n]
        r = jax.nn.sigmoid(gx_t[:, 0:H] + gh[:, 0:H])
        z = jax.nn.sigmoid(gx_t[:, H:2 * H] + gh[:, H:2 * H])
        n = jnp.tanh(gx_t[:, 2 * H:3 * H] + r * gh[:, 2 * H:3 * H])
        h = (1.0 - z) * n + z * h
        hs.append(h)

    # ---- lc2 over all timesteps, single lane-dense (S*Bp, LANE) store ----
    hs_all = jnp.concatenate(hs, axis=0)                      # (S*Bp, H)
    o_ref[...] = jnp.dot(hs_all, w2p_ref[...],
                         preferred_element_type=jnp.float32) + b2p_ref[...]


def rnn_net_forward(x, p):
    """x: (B, S, 10) float32 -> (B, S, 1) float32."""
    B, S, _ = x.shape
    Bp = max(SUBLANE, ((B + SUBLANE - 1) // SUBLANE) * SUBLANE)

    # Time-major, pad batch to Bp, flatten -> (S*Bp, IN). Done once by XLA.
    x_tm = jnp.transpose(x, (1, 0, 2)).astype(jnp.float32)    # (S, B, IN)
    x_tm = jnp.pad(x_tm, ((0, 0), (0, Bp - B), (0, 0)))       # (S, Bp, IN)
    x_flat = x_tm.reshape(S * Bp, IN_SIZE)

    # Pre-transpose / pre-pad weights outside the kernel.
    w1t = p['w1'].T                                            # (IN, MID)
    wiht = p['wih'].T                                          # (MID, 3H)
    whht = p['whh'].T                                          # (H, 3H)
    w2p = jnp.pad(p['w2'].T, ((0, 0), (0, LANE - OUT_SIZE)))   # (H, LANE)
    b2p = jnp.pad(p['b2'], ((0, 0), (0, LANE - OUT_SIZE)))     # (1, LANE)

    # Advisory cost estimate (matmul FLOPs + gate transcendentals).
    flops = 2 * S * Bp * (IN_SIZE * MID_SIZE
                          + MID_SIZE * 3 * HIDDEN
                          + HIDDEN * 3 * HIDDEN
                          + HIDDEN * LANE)
    transcendentals = 3 * S * Bp * HIDDEN
    n_param = (IN_SIZE * MID_SIZE + MID_SIZE
               + MID_SIZE * 3 * HIDDEN + HIDDEN * 3 * HIDDEN + 6 * HIDDEN
               + HIDDEN * LANE + LANE)
    bytes_accessed = 4 * (S * Bp * IN_SIZE + n_param + S * Bp * LANE)

    kernel = functools.partial(rnn_net_kernel, S=S, Bp=Bp)

    out_flat = pl.pallas_call(
        kernel,
        out_shape=jax.ShapeDtypeStruct((S * Bp, LANE), jnp.float32),
        in_specs=[pl.BlockSpec(memory_space=pltpu.MemorySpace.VMEM)] * 9,
        out_specs=pl.BlockSpec(memory_space=pltpu.MemorySpace.VMEM),
        cost_estimate=pl.CostEstimate(flops=flops,
                                      transcendentals=transcendentals,
                                      bytes_accessed=bytes_accessed),
    )(x_flat, w1t, p['b1'], wiht, whht, p['bih'], p['bhh'], w2p, b2p)

    # Column 0 is the real output; drop batch padding, back to batch-first.
    y = out_flat[:, :OUT_SIZE].reshape(S, Bp, OUT_SIZE)[:, :B, :]  # (S, B, 1)
    return jnp.transpose(y, (1, 0, 2))                              # (B, S, 1)


def rnn_net_reference(x, p):
    """Pure-JAX reference with identical semantics (for correctness check)."""
    H = HIDDEN
    h1 = jax.nn.relu(x @ p['w1'].T + p['b1'])                   # (B, S, 5)
    B = x.shape[0]

    def step(h, x_t):
        gx = x_t @ p['wih'].T + p['bih']
        gh = h @ p['whh'].T + p['bhh']
        r = jax.nn.sigmoid(gx[:, :H] + gh[:, :H])
        z = jax.nn.sigmoid(gx[:, H:2 * H] + gh[:, H:2 * H])
        n = jnp.tanh(gx[:, 2 * H:] + r * gh[:, 2 * H:])
        h_new = (1.0 - z) * n + z * h
        return h_new, h_new

    h0 = jnp.zeros((B, H), jnp.float32)
    _, hs = lax.scan(step, h0, jnp.transpose(h1, (1, 0, 2)))    # (S, B, H)
    hs = jnp.transpose(hs, (1, 0, 2))                           # (B, S, H)
    return hs @ p['w2'].T + p['b2']


def init_params(key):
    """Deterministic init with PyTorch-style uniform bounds."""
    ks = jax.random.split(key, 8)
    b_lc1 = 1.0 / jnp.sqrt(IN_SIZE)
    b_gru = 1.0 / jnp.sqrt(HIDDEN)
    b_lc2 = 1.0 / jnp.sqrt(HIDDEN)
    u = lambda k, shp, b: jax.random.uniform(k, shp, jnp.float32, -b, b)
    return {
        'w1': u(ks[0], (MID_SIZE, IN_SIZE), b_lc1),
        'b1': u(ks[1], (1, MID_SIZE), b_lc1),
        'wih': u(ks[2], (3 * HIDDEN, MID_SIZE), b_gru),
        'whh': u(ks[3], (3 * HIDDEN, HIDDEN), b_gru),
        'bih': u(ks[4], (1, 3 * HIDDEN), b_gru),
        'bhh': u(ks[5], (1, 3 * HIDDEN), b_gru),
        'w2': u(ks[6], (OUT_SIZE, HIDDEN), b_lc2),
        'b2': u(ks[7], (1, OUT_SIZE), b_lc2),
    }


if __name__ == "__main__":
    key = jax.random.PRNGKey(0)
    k_x, k_p = jax.random.split(key)
    B, S = 2, 8
    x = jax.random.normal(k_x, (B, S, IN_SIZE), jnp.float32)
    params = init_params(k_p)

    out = rnn_net_forward(x, params)
    out = jax.block_until_ready(out)

    ref = rnn_net_reference(x, params)
    assert out.shape == (B, S, OUT_SIZE)
    assert jnp.allclose(out, ref, atol=2e-5, rtol=2e-5), "mismatch vs reference"
    print("KERNEL_OK")
</pallas_src>

<mosaic_0001>
module attributes {stable_mosaic.version = 11 : i64} {
  func.func @rnn_net_kernel(%arg0: memref<64x10xf32, #tpu.memory_space<vmem>>, %arg1: memref<10x5xf32, #tpu.memory_space<vmem>>, %arg2: memref<1x5xf32, #tpu.memory_space<vmem>>, %arg3: memref<5x30xf32, #tpu.memory_space<vmem>>, %arg4: memref<10x30xf32, #tpu.memory_space<vmem>>, %arg5: memref<1x30xf32, #tpu.memory_space<vmem>>, %arg6: memref<1x30xf32, #tpu.memory_space<vmem>>, %arg7: memref<10x128xf32, #tpu.memory_space<vmem>>, %arg8: memref<1x128xf32, #tpu.memory_space<vmem>>, %arg9: memref<64x128xf32, #tpu.memory_space<vmem>>) attributes {dimension_semantics = [], scalar_prefetch = 0 : i64, scratch_operands = 0 : i64, tpu.core_type = #tpu.core_type<tc>} {
    %c0 = arith.constant 0 : index
    %c0_0 = arith.constant 0 : index
    %0 = vector.load %arg0[%c0, %c0_0] : memref<64x10xf32, #tpu.memory_space<vmem>>, vector<64x10xf32>
    %c0_1 = arith.constant 0 : index
    %c0_2 = arith.constant 0 : index
    %1 = vector.load %arg1[%c0_1, %c0_2] : memref<10x5xf32, #tpu.memory_space<vmem>>, vector<10x5xf32>
    %cst = arith.constant dense<0.000000e+00> : vector<64x5xf32>
    %2 = tpu.matmul %0, %1, %cst {dimension_numbers = #tpu.dot_dimension_numbers<[1], [0], [0], [1], [0, 0, 1, 1], [], []>} : vector<64x10xf32>, vector<10x5xf32>, vector<64x5xf32> -> vector<64x5xf32>
    %c0_3 = arith.constant 0 : index
    %c0_4 = arith.constant 0 : index
    %3 = vector.load %arg2[%c0_3, %c0_4] : memref<1x5xf32, #tpu.memory_space<vmem>>, vector<1x5xf32>
    %4 = vector.broadcast %3 : vector<1x5xf32> to vector<64x5xf32>
    %5 = arith.addf %2, %4 : vector<64x5xf32>
    %cst_5 = arith.constant 0.000000e+00 : f32
    %6 = vector.broadcast %cst_5 : f32 to vector<64x5xf32>
    %7 = arith.maximumf %5, %6 : vector<64x5xf32>
    %c0_6 = arith.constant 0 : index
    %c0_7 = arith.constant 0 : index
    %8 = vector.load %arg3[%c0_6, %c0_7] : memref<5x30xf32, #tpu.memory_space<vmem>>, vector<5x30xf32>
    %cst_8 = arith.constant dense<0.000000e+00> : vector<64x30xf32>
    %9 = tpu.matmul %7, %8, %cst_8 {dimension_numbers = #tpu.dot_dimension_numbers<[1], [0], [0], [1], [0, 0, 1, 1], [], []>} : vector<64x5xf32>, vector<5x30xf32>, vector<64x30xf32> -> vector<64x30xf32>
    %c0_9 = arith.constant 0 : index
    %c0_10 = arith.constant 0 : index
    %10 = vector.load %arg5[%c0_9, %c0_10] : memref<1x30xf32, #tpu.memory_space<vmem>>, vector<1x30xf32>
    %11 = vector.broadcast %10 : vector<1x30xf32> to vector<64x30xf32>
    %12 = arith.addf %9, %11 : vector<64x30xf32>
    %c0_11 = arith.constant 0 : index
    %c0_12 = arith.constant 0 : index
    %13 = vector.load %arg4[%c0_11, %c0_12] : memref<10x30xf32, #tpu.memory_space<vmem>>, vector<10x30xf32>
    %c0_13 = arith.constant 0 : index
    %c0_14 = arith.constant 0 : index
    %14 = vector.load %arg6[%c0_13, %c0_14] : memref<1x30xf32, #tpu.memory_space<vmem>>, vector<1x30xf32>
    %cst_15 = arith.constant 0.000000e+00 : f32
    %15 = vector.broadcast %cst_15 : f32 to vector<8x10xf32>
    %16 = vector.extract_strided_slice %12 {offsets = [0, 0], sizes = [8, 30], strides = [1, 1]} : vector<64x30xf32> to vector<8x30xf32>
    %cst_16 = arith.constant dense<0.000000e+00> : vector<8x30xf32>
    %17 = tpu.matmul %15, %13, %cst_16 {dimension_numbers = #tpu.dot_dimension_numbers<[1], [0], [0], [1], [0, 0, 1, 1], [], []>} : vector<8x10xf32>, vector<10x30xf32>, vector<8x30xf32> -> vector<8x30xf32>
    %18 = vector.broadcast %14 : vector<1x30xf32> to vector<8x30xf32>
    %19 = arith.addf %17, %18 : vector<8x30xf32>
    %20 = vector.extract_strided_slice %16 {offsets = [0, 0], sizes = [8, 10], strides = [1, 1]} : vector<8x30xf32> to vector<8x10xf32>
    %21 = vector.extract_strided_slice %19 {offsets = [0, 0], sizes = [8, 10], strides = [1, 1]} : vector<8x30xf32> to vector<8x10xf32>
    %22 = arith.addf %20, %21 : vector<8x10xf32>
    %23 = arith.negf %22 : vector<8x10xf32>
    %24 = math.exp %23 : vector<8x10xf32>
    %cst_17 = arith.constant 1.000000e+00 : f32
    %25 = vector.broadcast %cst_17 : f32 to vector<8x10xf32>
    %26 = arith.addf %25, %24 : vector<8x10xf32>
    %27 = arith.divf %25, %26 : vector<8x10xf32>
    %28 = vector.extract_strided_slice %16 {offsets = [0, 10], sizes = [8, 10], strides = [1, 1]} : vector<8x30xf32> to vector<8x10xf32>
    %29 = vector.extract_strided_slice %19 {offsets = [0, 10], sizes = [8, 10], strides = [1, 1]} : vector<8x30xf32> to vector<8x10xf32>
    %30 = arith.addf %28, %29 : vector<8x10xf32>
    %31 = arith.negf %30 : vector<8x10xf32>
    %32 = math.exp %31 : vector<8x10xf32>
    %cst_18 = arith.constant 1.000000e+00 : f32
    %33 = vector.broadcast %cst_18 : f32 to vector<8x10xf32>
    %34 = arith.addf %33, %32 : vector<8x10xf32>
    %35 = arith.divf %33, %34 : vector<8x10xf32>
    %36 = vector.extract_strided_slice %16 {offsets = [0, 20], sizes = [8, 10], strides = [1, 1]} : vector<8x30xf32> to vector<8x10xf32>
    %37 = vector.extract_strided_slice %19 {offsets = [0, 20], sizes = [8, 10], strides = [1, 1]} : vector<8x30xf32> to vector<8x10xf32>
    %38 = arith.mulf %27, %37 : vector<8x10xf32>
    %39 = arith.addf %36, %38 : vector<8x10xf32>
    %40 = math.tanh %39 : vector<8x10xf32>
    %cst_19 = arith.constant 1.000000e+00 : f32
    %41 = vector.broadcast %cst_19 : f32 to vector<8x10xf32>
    %42 = arith.subf %41, %35 : vector<8x10xf32>
    %43 = arith.mulf %42, %40 : vector<8x10xf32>
    %44 = arith.mulf %35, %15 : vector<8x10xf32>
    %45 = arith.addf %43, %44 : vector<8x10xf32>
    %46 = vector.extract_strided_slice %12 {offsets = [8, 0], sizes = [8, 30], strides = [1, 1]} : vector<64x30xf32> to vector<8x30xf32>
    %cst_20 = arith.constant dense<0.000000e+00> : vector<8x30xf32>
    %47 = tpu.matmul %45, %13, %cst_20 {dimension_numbers = #tpu.dot_dimension_numbers<[1], [0], [0], [1], [0, 0, 1, 1], [], []>} : vector<8x10xf32>, vector<10x30xf32>, vector<8x30xf32> -> vector<8x30xf32>
    %48 = vector.broadcast %14 : vector<1x30xf32> to vector<8x30xf32>
    %49 = arith.addf %47, %48 : vector<8x30xf32>
    %50 = vector.extract_strided_slice %46 {offsets = [0, 0], sizes = [8, 10], strides = [1, 1]} : vector<8x30xf32> to vector<8x10xf32>
    %51 = vector.extract_strided_slice %49 {offsets = [0, 0], sizes = [8, 10], strides = [1, 1]} : vector<8x30xf32> to vector<8x10xf32>
    %52 = arith.addf %50, %51 : vector<8x10xf32>
    %53 = arith.negf %52 : vector<8x10xf32>
    %54 = math.exp %53 : vector<8x10xf32>
    %cst_21 = arith.constant 1.000000e+00 : f32
    %55 = vector.broadcast %cst_21 : f32 to vector<8x10xf32>
    %56 = arith.addf %55, %54 : vector<8x10xf32>
    %57 = arith.divf %55, %56 : vector<8x10xf32>
    %58 = vector.extract_strided_slice %46 {offsets = [0, 10], sizes = [8, 10], strides = [1, 1]} : vector<8x30xf32> to vector<8x10xf32>
    %59 = vector.extract_strided_slice %49 {offsets = [0, 10], sizes = [8, 10], strides = [1, 1]} : vector<8x30xf32> to vector<8x10xf32>
    %60 = arith.addf %58, %59 : vector<8x10xf32>
    %61 = arith.negf %60 : vector<8x10xf32>
    %62 = math.exp %61 : vector<8x10xf32>
    %cst_22 = arith.constant 1.000000e+00 : f32
    %63 = vector.broadcast %cst_22 : f32 to vector<8x10xf32>
    %64 = arith.addf %63, %62 : vector<8x10xf32>
    %65 = arith.divf %63, %64 : vector<8x10xf32>
    %66 = vector.extract_strided_slice %46 {offsets = [0, 20], sizes = [8, 10], strides = [1, 1]} : vector<8x30xf32> to vector<8x10xf32>
    %67 = vector.extract_strided_slice %49 {offsets = [0, 20], sizes = [8, 10], strides = [1, 1]} : vector<8x30xf32> to vector<8x10xf32>
    %68 = arith.mulf %57, %67 : vector<8x10xf32>
    %69 = arith.addf %66, %68 : vector<8x10xf32>
    %70 = math.tanh %69 : vector<8x10xf32>
    %cst_23 = arith.constant 1.000000e+00 : f32
    %71 = vector.broadcast %cst_23 : f32 to vector<8x10xf32>
    %72 = arith.subf %71, %65 : vector<8x10xf32>
    %73 = arith.mulf %72, %70 : vector<8x10xf32>
    %74 = arith.mulf %65, %45 : vector<8x10xf32>
    %75 = arith.addf %73, %74 : vector<8x10xf32>
    %76 = vector.extract_strided_slice %12 {offsets = [16, 0], sizes = [8, 30], strides = [1, 1]} : vector<64x30xf32> to vector<8x30xf32>
    %cst_24 = arith.constant dense<0.000000e+00> : vector<8x30xf32>
    %77 = tpu.matmul %75, %13, %cst_24 {dimension_numbers = #tpu.dot_dimension_numbers<[1], [0], [0], [1], [0, 0, 1, 1], [], []>} : vector<8x10xf32>, vector<10x30xf32>, vector<8x30xf32> -> vector<8x30xf32>
    %78 = vector.broadcast %14 : vector<1x30xf32> to vector<8x30xf32>
    %79 = arith.addf %77, %78 : vector<8x30xf32>
    %80 = vector.extract_strided_slice %76 {offsets = [0, 0], sizes = [8, 10], strides = [1, 1]} : vector<8x30xf32> to vector<8x10xf32>
    %81 = vector.extract_strided_slice %79 {offsets = [0, 0], sizes = [8, 10], strides = [1, 1]} : vector<8x30xf32> to vector<8x10xf32>
    %82 = arith.addf %80, %81 : vector<8x10xf32>
    %83 = arith.negf %82 : vector<8x10xf32>
    %84 = math.exp %83 : vector<8x10xf32>
    %cst_25 = arith.constant 1.000000e+00 : f32
    %85 = vector.broadcast %cst_25 : f32 to vector<8x10xf32>
    %86 = arith.addf %85, %84 : vector<8x10xf32>
    %87 = arith.divf %85, %86 : vector<8x10xf32>
    %88 = vector.extract_strided_slice %76 {offsets = [0, 10], sizes = [8, 10], strides = [1, 1]} : vector<8x30xf32> to vector<8x10xf32>
    %89 = vector.extract_strided_slice %79 {offsets = [0, 10], sizes = [8, 10], strides = [1, 1]} : vector<8x30xf32> to vector<8x10xf32>
    %90 = arith.addf %88, %89 : vector<8x10xf32>
    %91 = arith.negf %90 : vector<8x10xf32>
    %92 = math.exp %91 : vector<8x10xf32>
    %cst_26 = arith.constant 1.000000e+00 : f32
    %93 = vector.broadcast %cst_26 : f32 to vector<8x10xf32>
    %94 = arith.addf %93, %92 : vector<8x10xf32>
    %95 = arith.divf %93, %94 : vector<8x10xf32>
    %96 = vector.extract_strided_slice %76 {offsets = [0, 20], sizes = [8, 10], strides = [1, 1]} : vector<8x30xf32> to vector<8x10xf32>
    %97 = vector.extract_strided_slice %79 {offsets = [0, 20], sizes = [8, 10], strides = [1, 1]} : vector<8x30xf32> to vector<8x10xf32>
    %98 = arith.mulf %87, %97 : vector<8x10xf32>
    %99 = arith.addf %96, %98 : vector<8x10xf32>
    %100 = math.tanh %99 : vector<8x10xf32>
    %cst_27 = arith.constant 1.000000e+00 : f32
    %101 = vector.broadcast %cst_27 : f32 to vector<8x10xf32>
    %102 = arith.subf %101, %95 : vector<8x10xf32>
    %103 = arith.mulf %102, %100 : vector<8x10xf32>
    %104 = arith.mulf %95, %75 : vector<8x10xf32>
    %105 = arith.addf %103, %104 : vector<8x10xf32>
    %106 = vector.extract_strided_slice %12 {offsets = [24, 0], sizes = [8, 30], strides = [1, 1]} : vector<64x30xf32> to vector<8x30xf32>
    %cst_28 = arith.constant dense<0.000000e+00> : vector<8x30xf32>
    %107 = tpu.matmul %105, %13, %cst_28 {dimension_numbers = #tpu.dot_dimension_numbers<[1], [0], [0], [1], [0, 0, 1, 1], [], []>} : vector<8x10xf32>, vector<10x30xf32>, vector<8x30xf32> -> vector<8x30xf32>
    %108 = vector.broadcast %14 : vector<1x30xf32> to vector<8x30xf32>
    %109 = arith.addf %107, %108 : vector<8x30xf32>
    %110 = vector.extract_strided_slice %106 {offsets = [0, 0], sizes = [8, 10], strides = [1, 1]} : vector<8x30xf32> to vector<8x10xf32>
    %111 = vector.extract_strided_slice %109 {offsets = [0, 0], sizes = [8, 10], strides = [1, 1]} : vector<8x30xf32> to vector<8x10xf32>
    %112 = arith.addf %110, %111 : vector<8x10xf32>
    %113 = arith.negf %112 : vector<8x10xf32>
    %114 = math.exp %113 : vector<8x10xf32>
    %cst_29 = arith.constant 1.000000e+00 : f32
    %115 = vector.broadcast %cst_29 : f32 to vector<8x10xf32>
    %116 = arith.addf %115, %114 : vector<8x10xf32>
    %117 = arith.divf %115, %116 : vector<8x10xf32>
    %118 = vector.extract_strided_slice %106 {offsets = [0, 10], sizes = [8, 10], strides = [1, 1]} : vector<8x30xf32> to vector<8x10xf32>
    %119 = vector.extract_strided_slice %109 {offsets = [0, 10], sizes = [8, 10], strides = [1, 1]} : vector<8x30xf32> to vector<8x10xf32>
    %120 = arith.addf %118, %119 : vector<8x10xf32>
    %121 = arith.negf %120 : vector<8x10xf32>
    %122 = math.exp %121 : vector<8x10xf32>
    %cst_30 = arith.constant 1.000000e+00 : f32
    %123 = vector.broadcast %cst_30 : f32 to vector<8x10xf32>
    %124 = arith.addf %123, %122 : vector<8x10xf32>
    %125 = arith.divf %123, %124 : vector<8x10xf32>
    %126 = vector.extract_strided_slice %106 {offsets = [0, 20], sizes = [8, 10], strides = [1, 1]} : vector<8x30xf32> to vector<8x10xf32>
    %127 = vector.extract_strided_slice %109 {offsets = [0, 20], sizes = [8, 10], strides = [1, 1]} : vector<8x30xf32> to vector<8x10xf32>
    %128 = arith.mulf %117, %127 : vector<8x10xf32>
    %129 = arith.addf %126, %128 : vector<8x10xf32>
    %130 = math.tanh %129 : vector<8x10xf32>
    %cst_31 = arith.constant 1.000000e+00 : f32
    %131 = vector.broadcast %cst_31 : f32 to vector<8x10xf32>
    %132 = arith.subf %131, %125 : vector<8x10xf32>
    %133 = arith.mulf %132, %130 : vector<8x10xf32>
    %134 = arith.mulf %125, %105 : vector<8x10xf32>
    %135 = arith.addf %133, %134 : vector<8x10xf32>
    %136 = vector.extract_strided_slice %12 {offsets = [32, 0], sizes = [8, 30], strides = [1, 1]} : vector<64x30xf32> to vector<8x30xf32>
    %cst_32 = arith.constant dense<0.000000e+00> : vector<8x30xf32>
    %137 = tpu.matmul %135, %13, %cst_32 {dimension_numbers = #tpu.dot_dimension_numbers<[1], [0], [0], [1], [0, 0, 1, 1], [], []>} : vector<8x10xf32>, vector<10x30xf32>, vector<8x30xf32> -> vector<8x30xf32>
    %138 = vector.broadcast %14 : vector<1x30xf32> to vector<8x30xf32>
    %139 = arith.addf %137, %138 : vector<8x30xf32>
    %140 = vector.extract_strided_slice %136 {offsets = [0, 0], sizes = [8, 10], strides = [1, 1]} : vector<8x30xf32> to vector<8x10xf32>
    %141 = vector.extract_strided_slice %139 {offsets = [0, 0], sizes = [8, 10], strides = [1, 1]} : vector<8x30xf32> to vector<8x10xf32>
    %142 = arith.addf %140, %141 : vector<8x10xf32>
    %143 = arith.negf %142 : vector<8x10xf32>
    %144 = math.exp %143 : vector<8x10xf32>
    %cst_33 = arith.constant 1.000000e+00 : f32
    %145 = vector.broadcast %cst_33 : f32 to vector<8x10xf32>
    %146 = arith.addf %145, %144 : vector<8x10xf32>
    %147 = arith.divf %145, %146 : vector<8x10xf32>
    %148 = vector.extract_strided_slice %136 {offsets = [0, 10], sizes = [8, 10], strides = [1, 1]} : vector<8x30xf32> to vector<8x10xf32>
    %149 = vector.extract_strided_slice %139 {offsets = [0, 10], sizes = [8, 10], strides = [1, 1]} : vector<8x30xf32> to vector<8x10xf32>
    %150 = arith.addf %148, %149 : vector<8x10xf32>
    %151 = arith.negf %150 : vector<8x10xf32>
    %152 = math.exp %151 : vector<8x10xf32>
    %cst_34 = arith.constant 1.000000e+00 : f32
    %153 = vector.broadcast %cst_34 : f32 to vector<8x10xf32>
    %154 = arith.addf %153, %152 : vector<8x10xf32>
    %155 = arith.divf %153, %154 : vector<8x10xf32>
    %156 = vector.extract_strided_slice %136 {offsets = [0, 20], sizes = [8, 10], strides = [1, 1]} : vector<8x30xf32> to vector<8x10xf32>
    %157 = vector.extract_strided_slice %139 {offsets = [0, 20], sizes = [8, 10], strides = [1, 1]} : vector<8x30xf32> to vector<8x10xf32>
    %158 = arith.mulf %147, %157 : vector<8x10xf32>
    %159 = arith.addf %156, %158 : vector<8x10xf32>
    %160 = math.tanh %159 : vector<8x10xf32>
    %cst_35 = arith.constant 1.000000e+00 : f32
    %161 = vector.broadcast %cst_35 : f32 to vector<8x10xf32>
    %162 = arith.subf %161, %155 : vector<8x10xf32>
    %163 = arith.mulf %162, %160 : vector<8x10xf32>
    %164 = arith.mulf %155, %135 : vector<8x10xf32>
    %165 = arith.addf %163, %164 : vector<8x10xf32>
    %166 = vector.extract_strided_slice %12 {offsets = [40, 0], sizes = [8, 30], strides = [1, 1]} : vector<64x30xf32> to vector<8x30xf32>
    %cst_36 = arith.constant dense<0.000000e+00> : vector<8x30xf32>
    %167 = tpu.matmul %165, %13, %cst_36 {dimension_numbers = #tpu.dot_dimension_numbers<[1], [0], [0], [1], [0, 0, 1, 1], [], []>} : vector<8x10xf32>, vector<10x30xf32>, vector<8x30xf32> -> vector<8x30xf32>
    %168 = vector.broadcast %14 : vector<1x30xf32> to vector<8x30xf32>
    %169 = arith.addf %167, %168 : vector<8x30xf32>
    %170 = vector.extract_strided_slice %166 {offsets = [0, 0], sizes = [8, 10], strides = [1, 1]} : vector<8x30xf32> to vector<8x10xf32>
    %171 = vector.extract_strided_slice %169 {offsets = [0, 0], sizes = [8, 10], strides = [1, 1]} : vector<8x30xf32> to vector<8x10xf32>
    %172 = arith.addf %170, %171 : vector<8x10xf32>
    %173 = arith.negf %172 : vector<8x10xf32>
    %174 = math.exp %173 : vector<8x10xf32>
    %cst_37 = arith.constant 1.000000e+00 : f32
    %175 = vector.broadcast %cst_37 : f32 to vector<8x10xf32>
    %176 = arith.addf %175, %174 : vector<8x10xf32>
    %177 = arith.divf %175, %176 : vector<8x10xf32>
    %178 = vector.extract_strided_slice %166 {offsets = [0, 10], sizes = [8, 10], strides = [1, 1]} : vector<8x30xf32> to vector<8x10xf32>
    %179 = vector.extract_strided_slice %169 {offsets = [0, 10], sizes = [8, 10], strides = [1, 1]} : vector<8x30xf32> to vector<8x10xf32>
    %180 = arith.addf %178, %179 : vector<8x10xf32>
    %181 = arith.negf %180 : vector<8x10xf32>
    %182 = math.exp %181 : vector<8x10xf32>
    %cst_38 = arith.constant 1.000000e+00 : f32
    %183 = vector.broadcast %cst_38 : f32 to vector<8x10xf32>
    %184 = arith.addf %183, %182 : vector<8x10xf32>
    %185 = arith.divf %183, %184 : vector<8x10xf32>
    %186 = vector.extract_strided_slice %166 {offsets = [0, 20], sizes = [8, 10], strides = [1, 1]} : vector<8x30xf32> to vector<8x10xf32>
    %187 = vector.extract_strided_slice %169 {offsets = [0, 20], sizes = [8, 10], strides = [1, 1]} : vector<8x30xf32> to vector<8x10xf32>
    %188 = arith.mulf %177, %187 : vector<8x10xf32>
    %189 = arith.addf %186, %188 : vector<8x10xf32>
    %190 = math.tanh %189 : vector<8x10xf32>
    %cst_39 = arith.constant 1.000000e+00 : f32
    %191 = vector.broadcast %cst_39 : f32 to vector<8x10xf32>
    %192 = arith.subf %191, %185 : vector<8x10xf32>
    %193 = arith.mulf %192, %190 : vector<8x10xf32>
    %194 = arith.mulf %185, %165 : vector<8x10xf32>
    %195 = arith.addf %193, %194 : vector<8x10xf32>
    %196 = vector.extract_strided_slice %12 {offsets = [48, 0], sizes = [8, 30], strides = [1, 1]} : vector<64x30xf32> to vector<8x30xf32>
    %cst_40 = arith.constant dense<0.000000e+00> : vector<8x30xf32>
    %197 = tpu.matmul %195, %13, %cst_40 {dimension_numbers = #tpu.dot_dimension_numbers<[1], [0], [0], [1], [0, 0, 1, 1], [], []>} : vector<8x10xf32>, vector<10x30xf32>, vector<8x30xf32> -> vector<8x30xf32>
    %198 = vector.broadcast %14 : vector<1x30xf32> to vector<8x30xf32>
    %199 = arith.addf %197, %198 : vector<8x30xf32>
    %200 = vector.extract_strided_slice %196 {offsets = [0, 0], sizes = [8, 10], strides = [1, 1]} : vector<8x30xf32> to vector<8x10xf32>
    %201 = vector.extract_strided_slice %199 {offsets = [0, 0], sizes = [8, 10], strides = [1, 1]} : vector<8x30xf32> to vector<8x10xf32>
    %202 = arith.addf %200, %201 : vector<8x10xf32>
    %203 = arith.negf %202 : vector<8x10xf32>
    %204 = math.exp %203 : vector<8x10xf32>
    %cst_41 = arith.constant 1.000000e+00 : f32
    %205 = vector.broadcast %cst_41 : f32 to vector<8x10xf32>
    %206 = arith.addf %205, %204 : vector<8x10xf32>
    %207 = arith.divf %205, %206 : vector<8x10xf32>
    %208 = vector.extract_strided_slice %196 {offsets = [0, 10], sizes = [8, 10], strides = [1, 1]} : vector<8x30xf32> to vector<8x10xf32>
    %209 = vector.extract_strided_slice %199 {offsets = [0, 10], sizes = [8, 10], strides = [1, 1]} : vector<8x30xf32> to vector<8x10xf32>
    %210 = arith.addf %208, %209 : vector<8x10xf32>
    %211 = arith.negf %210 : vector<8x10xf32>
    %212 = math.exp %211 : vector<8x10xf32>
    %cst_42 = arith.constant 1.000000e+00 : f32
    %213 = vector.broadcast %cst_42 : f32 to vector<8x10xf32>
    %214 = arith.addf %213, %212 : vector<8x10xf32>
    %215 = arith.divf %213, %214 : vector<8x10xf32>
    %216 = vector.extract_strided_slice %196 {offsets = [0, 20], sizes = [8, 10], strides = [1, 1]} : vector<8x30xf32> to vector<8x10xf32>
    %217 = vector.extract_strided_slice %199 {offsets = [0, 20], sizes = [8, 10], strides = [1, 1]} : vector<8x30xf32> to vector<8x10xf32>
    %218 = arith.mulf %207, %217 : vector<8x10xf32>
    %219 = arith.addf %216, %218 : vector<8x10xf32>
    %220 = math.tanh %219 : vector<8x10xf32>
    %cst_43 = arith.constant 1.000000e+00 : f32
    %221 = vector.broadcast %cst_43 : f32 to vector<8x10xf32>
    %222 = arith.subf %221, %215 : vector<8x10xf32>
    %223 = arith.mulf %222, %220 : vector<8x10xf32>
    %224 = arith.mulf %215, %195 : vector<8x10xf32>
    %225 = arith.addf %223, %224 : vector<8x10xf32>
    %226 = vector.extract_strided_slice %12 {offsets = [56, 0], sizes = [8, 30], strides = [1, 1]} : vector<64x30xf32> to vector<8x30xf32>
    %cst_44 = arith.constant dense<0.000000e+00> : vector<8x30xf32>
    %227 = tpu.matmul %225, %13, %cst_44 {dimension_numbers = #tpu.dot_dimension_numbers<[1], [0], [0], [1], [0, 0, 1, 1], [], []>} : vector<8x10xf32>, vector<10x30xf32>, vector<8x30xf32> -> vector<8x30xf32>
    %228 = vector.broadcast %14 : vector<1x30xf32> to vector<8x30xf32>
    %229 = arith.addf %227, %228 : vector<8x30xf32>
    %230 = vector.extract_strided_slice %226 {offsets = [0, 0], sizes = [8, 10], strides = [1, 1]} : vector<8x30xf32> to vector<8x10xf32>
    %231 = vector.extract_strided_slice %229 {offsets = [0, 0], sizes = [8, 10], strides = [1, 1]} : vector<8x30xf32> to vector<8x10xf32>
    %232 = arith.addf %230, %231 : vector<8x10xf32>
    %233 = arith.negf %232 : vector<8x10xf32>
    %234 = math.exp %233 : vector<8x10xf32>
    %cst_45 = arith.constant 1.000000e+00 : f32
    %235 = vector.broadcast %cst_45 : f32 to vector<8x10xf32>
    %236 = arith.addf %235, %234 : vector<8x10xf32>
    %237 = arith.divf %235, %236 : vector<8x10xf32>
    %238 = vector.extract_strided_slice %226 {offsets = [0, 10], sizes = [8, 10], strides = [1, 1]} : vector<8x30xf32> to vector<8x10xf32>
    %239 = vector.extract_strided_slice %229 {offsets = [0, 10], sizes = [8, 10], strides = [1, 1]} : vector<8x30xf32> to vector<8x10xf32>
    %240 = arith.addf %238, %239 : vector<8x10xf32>
    %241 = arith.negf %240 : vector<8x10xf32>
    %242 = math.exp %241 : vector<8x10xf32>
    %cst_46 = arith.constant 1.000000e+00 : f32
    %243 = vector.broadcast %cst_46 : f32 to vector<8x10xf32>
    %244 = arith.addf %243, %242 : vector<8x10xf32>
    %245 = arith.divf %243, %244 : vector<8x10xf32>
    %246 = vector.extract_strided_slice %226 {offsets = [0, 20], sizes = [8, 10], strides = [1, 1]} : vector<8x30xf32> to vector<8x10xf32>
    %247 = vector.extract_strided_slice %229 {offsets = [0, 20], sizes = [8, 10], strides = [1, 1]} : vector<8x30xf32> to vector<8x10xf32>
    %248 = arith.mulf %237, %247 : vector<8x10xf32>
    %249 = arith.addf %246, %248 : vector<8x10xf32>
    %250 = math.tanh %249 : vector<8x10xf32>
    %cst_47 = arith.constant 1.000000e+00 : f32
    %251 = vector.broadcast %cst_47 : f32 to vector<8x10xf32>
    %252 = arith.subf %251, %245 : vector<8x10xf32>
    %253 = arith.mulf %252, %250 : vector<8x10xf32>
    %254 = arith.mulf %245, %225 : vector<8x10xf32>
    %255 = arith.addf %253, %254 : vector<8x10xf32>
    %256 = tpu.concatenate %45, %75, %105, %135, %165, %195, %225, %255 in 0 : vector<8x10xf32>, vector<8x10xf32>, vector<8x10xf32>, vector<8x10xf32>, vector<8x10xf32>, vector<8x10xf32>, vector<8x10xf32>, vector<8x10xf32> -> vector<64x10xf32>
    %c0_48 = arith.constant 0 : index
    %c0_49 = arith.constant 0 : index
    %257 = vector.load %arg7[%c0_48, %c0_49] : memref<10x128xf32, #tpu.memory_space<vmem>>, vector<10x128xf32>
    %cst_50 = arith.constant dense<0.000000e+00> : vector<64x128xf32>
    %258 = tpu.matmul %256, %257, %cst_50 {dimension_numbers = #tpu.dot_dimension_numbers<[1], [0], [0], [1], [0, 0, 1, 1], [], []>} : vector<64x10xf32>, vector<10x128xf32>, vector<64x128xf32> -> vector<64x128xf32>
    %c0_51 = arith.constant 0 : index
    %c0_52 = arith.constant 0 : index
    %259 = vector.load %arg8[%c0_51, %c0_52] : memref<1x128xf32, #tpu.memory_space<vmem>>, vector<1x128xf32>
    %260 = vector.broadcast %259 : vector<1x128xf32> to vector<64x128xf32>
    %261 = arith.addf %258, %260 : vector<64x128xf32>
    %c0_53 = arith.constant 0 : index
    %c0_54 = arith.constant 0 : index
    %262 = vector.load %arg9[%c0_53, %c0_54] : memref<64x128xf32, #tpu.memory_space<vmem>>, vector<64x128xf32>
    tpu.vector_store %arg9[%c0_53, %c0_54], %261 {strides = array<i32>} : memref<64x128xf32, #tpu.memory_space<vmem>>, vector<64x128xf32>,
    return
  }
}

</mosaic_0001>

<llo_original>
// kernel: tpu_custom_call.1
$region0: #{tpu_custom_call.1}
  #allocation0 [shape = 'u32[]', space=smem, size = 0x4, offset = 0x4, fixed_abs, tag = 'smem constant byte address 0x4 - core index']
  #allocation1 [shape = 'u32[144,128]{1,0:T(1,128)}', space=vmem, size = 0x12000, scoped, tag = 'internal scratch']
  %s0 = inlined_call_operand.vmem [shape: f32[64,10], index: 0, kind: input, shape index: {}]
  %s1 = inlined_call_operand.vmem [shape: f32[10,5], index: 1, kind: input, shape index: {}]
  %s2 = inlined_call_operand.vmem [shape: f32[1,5], index: 2, kind: input, shape index: {}]
  %s3 = inlined_call_operand.vmem [shape: f32[5,30], index: 3, kind: input, shape index: {}]
  %s4 = inlined_call_operand.vmem [shape: f32[10,30], index: 4, kind: input, shape index: {}]
  %s5 = inlined_call_operand.vmem [shape: f32[1,30], index: 5, kind: input, shape index: {}]
  %s6 = inlined_call_operand.vmem [shape: f32[1,30], index: 6, kind: input, shape index: {}]
  %s7 = inlined_call_operand.vmem [shape: f32[10,128], index: 7, kind: input, shape index: {}]
  %s8 = inlined_call_operand.vmem [shape: f32[1,128], index: 8, kind: input, shape index: {}]
  %s9 = inlined_call_operand.hbm [shape: f32[64,128], index: 9, kind: output, shape index: {}]
  %s10 = sld [smem:[#allocation0]]
  $region46: #{tpu_custom_call.1} parent=0
    _
  %s12 = ssub.s32 1, %s10
  %s13 = scalar_select 0, %s12, %s10
  $region1: #{tpu_custom_call.1} parent=0
    #allocation2 [shape = 'u8[32768]{0}', space=vmem, size = 0x8000, scoped, tag = 'output window, operand 0, single buffered']
    #allocation3 [shape = 's32[1]{0}', space=sflag, size = 0x4, scoped, tag = 'scoped memory for tpu_custom_call.1']
    %14 = vsyncpa [#allocation3], 0
    // Predicated region
    $region2: #{tpu_custom_call.1} parent=1 // pred_check
      _
    $region3: #{tpu_custom_call.1} parent=1 // pred_check_branch
      %16 = sbr.rel (0) target = $region5
    $region4: #{tpu_custom_call.1} parent=1 // pred_region
      _
    $region5: #{tpu_custom_call.1} parent=1 // pred_fallthru
      _
    // Predicated region
    $region6: #{tpu_custom_call.1} parent=1 // pred_check
      _
    $region7: #{tpu_custom_call.1} parent=1 // pred_check_branch
      %18 = sbr.rel (0) target = $region9
    $region8: #{tpu_custom_call.1} parent=1 // pred_region
      _
    $region9: #{tpu_custom_call.1} parent=1 // pred_fallthru
      _
    // Predicated region
    $region10: #{tpu_custom_call.1} parent=1 // pred_check
      _
    $region11: #{tpu_custom_call.1} parent=1 // pred_check_branch
      %20 = sbr.rel (0) target = $region13
    $region12: #{tpu_custom_call.1} parent=1 // pred_region
      _
    $region13: #{tpu_custom_call.1} parent=1 // pred_fallthru
      _
    // Predicated region
    $region14: #{tpu_custom_call.1} parent=1 // pred_check
      _
    $region15: #{tpu_custom_call.1} parent=1 // pred_check_branch
      %22 = sbr.rel (0) target = $region17
    $region16: #{tpu_custom_call.1} parent=1 // pred_region
      _
    $region17: #{tpu_custom_call.1} parent=1 // pred_fallthru
      _
    // Predicated region
    $region18: #{tpu_custom_call.1} parent=1 // pred_check
      _
    $region19: #{tpu_custom_call.1} parent=1 // pred_check_branch
      %24 = sbr.rel (0) target = $region21
    $region20: #{tpu_custom_call.1} parent=1 // pred_region
      _
    $region21: #{tpu_custom_call.1} parent=1 // pred_fallthru
      _
    // Predicated region
    $region22: #{tpu_custom_call.1} parent=1 // pred_check
      _
    $region23: #{tpu_custom_call.1} parent=1 // pred_check_branch
      %26 = sbr.rel (0) target = $region25
    $region24: #{tpu_custom_call.1} parent=1 // pred_region
      _
    $region25: #{tpu_custom_call.1} parent=1 // pred_fallthru
      _
    // Predicated region
    $region26: #{tpu_custom_call.1} parent=1 // pred_check
      _
    $region27: #{tpu_custom_call.1} parent=1 // pred_check_branch
      %28 = sbr.rel (0) target = $region29
    $region28: #{tpu_custom_call.1} parent=1 // pred_region
      _
    $region29: #{tpu_custom_call.1} parent=1 // pred_fallthru
      _
    // Predicated region
    $region30: #{tpu_custom_call.1} parent=1 // pred_check
      _
    $region31: #{tpu_custom_call.1} parent=1 // pred_check_branch
      %30 = sbr.rel (0) target = $region33
    $region32: #{tpu_custom_call.1} parent=1 // pred_region
      _
    $region33: #{tpu_custom_call.1} parent=1 // pred_fallthru
      _
    // Predicated region
    $region34: #{tpu_custom_call.1} parent=1 // pred_check
      _
    $region35: #{tpu_custom_call.1} parent=1 // pred_check_branch
      %32 = sbr.rel (0) target = $region37
    $region36: #{tpu_custom_call.1} parent=1 // pred_region
      _
    $region37: #{tpu_custom_call.1} parent=1 // pred_fallthru
      _
    %v33 = vld [vmem:[%s0] sm:$0xff]
    %v34 = vld [vmem:[%s0 + $0x8] sm:$0xff]
    %v35 = vld [vmem:[%s0 + $0x10] sm:$0xff]
    %v36 = vld [vmem:[%s0 + $0x18] sm:$0xff]
    %v37 = vld [vmem:[%s0 + $0x20] sm:$0xff]
    %v38 = vld [vmem:[%s0 + $0x28] sm:$0xff]
    %v39 = vld [vmem:[%s0 + $0x30] sm:$0xff]
    %v40 = vld [vmem:[%s0 + $0x38] sm:$0xff]
    %v41 = vld [vmem:[%s1] sm:$0xff]
    %v42 = vld [vmem:[%s1 + $0x8] sm:$0x3]
    %v43 = vld [vmem:[%s2] sm:$0x1]
    %v45 = vlaneseq
    %v46 = vshrl.u32 %v45, 7
    %v47 = vsub.s32 0, %v46
    %v48 = vrot.slane %v43, %v47
    %vm50 = vcmask 80896
    %v52 = vsel %vm50, %v33, 0
    %v55 = vsel %vm50, %v34, 0
    %v58 = vsel %vm50, %v35, 0
    %v61 = vsel %vm50, %v36, 0
    %v64 = vsel %vm50, %v37, 0
    %v67 = vsel %vm50, %v38, 0
    %v70 = vsel %vm50, %v39, 0
    %v73 = vsel %vm50, %v40, 0
    %vm75 = vcmask 1041408
    %v77 = vsel %vm75, %v42, 0
    %79 = vmatprep.subr.mxu0 0.0
    %80 = vmatpush1.msra.mxu0 %v41
    %81 = vmatprep.subr.mxu0 0.0
    %82 = vmatpush1.msra.mxu0 %v77
    %83 = vmatprep.subr.mxu0 0.0
    %84 = vmatpush1.msra.mxu0 0.0
    %85 = vmatprep.subr.mxu0 0.0
    %86 = vmatpush1.msra.mxu0 0.0
    %87 = vmatprep.subr.mxu0 0.0
    %88 = vmatpush1.msra.mxu0 0.0
    %89 = vmatprep.subr.mxu0 0.0
    %90 = vmatpush1.msra.mxu0 0.0
    %91 = vmatprep.subr.mxu0 0.0
    %92 = vmatpush1.msra.mxu0 0.0
    %93 = vmatprep.subr.mxu0 0.0
    %94 = vmatpush1.msra.mxu0 0.0
    %95 = vmatprep.subr.mxu0 0.0
    %96 = vmatpush1.msra.mxu0 0.0
    %97 = vmatprep.subr.mxu0 0.0
    %98 = vmatpush1.msra.mxu0 0.0
    %99 = vmatprep.subr.mxu0 0.0
    %100 = vmatpush1.msra.mxu0 0.0
    %101 = vmatprep.subr.mxu0 0.0
    %102 = vmatpush1.msra.mxu0 0.0
    %103 = vmatprep.subr.mxu0 0.0
    %104 = vmatpush1.msra.mxu0 0.0
    %105 = vmatprep.subr.mxu0 0.0
    %106 = vmatpush1.msra.mxu0 0.0
    %107 = vmatprep.subr.mxu0 0.0
    %108 = vmatpush1.msra.mxu0 0.0
    %109 = vmatprep.subr.mxu0 0.0
    %110 = vmatpush1.msra.mxu0 0.0
    %111 = vmatprep.subr.mxu0 0.0
    %112 = vmatpush1.msra.mxu0 0.0
    %113 = vmatprep.subr.mxu0 0.0
    %114 = vmatpush1.msra.mxu0 0.0
    %115 = vmatprep.subr.mxu0 0.0
    %116 = vmatpush1.msra.mxu0 0.0
    %117 = vmatprep.subr.mxu0 0.0
    %118 = vmatpush1.msra.mxu0 0.0
    %119 = vmatprep.subr.mxu0 0.0
    %120 = vmatpush1.msra.mxu0 0.0
    %121 = vmatprep.subr.mxu0 0.0
    %122 = vmatpush1.msra.mxu0 0.0
    %123 = vmatprep.subr.mxu0 0.0
    %124 = vmatpush1.msra.mxu0 0.0
    %125 = vmatprep.subr.mxu0 0.0
    %126 = vmatpush1.msra.mxu0 0.0
    %127 = vmatprep.subr.mxu0 0.0
    %128 = vmatpush1.msra.mxu0 0.0
    %129 = vmatprep.subr.mxu0 0.0
    %130 = vmatpush1.msra.mxu0 0.0
    %131 = vmatprep.subr.mxu0 0.0
    %132 = vmatpush1.msra.mxu0 0.0
    %133 = vmatprep.subr.mxu0 0.0
    %134 = vmatpush1.msra.mxu0 0.0
    %135 = vmatprep.subr.mxu0 0.0
    %136 = vmatpush1.msra.mxu0 0.0
    %137 = vmatprep.subr.mxu0 0.0
    %138 = vmatpush1.msra.mxu0 0.0
    %139 = vmatprep.subr.mxu0 0.0
    %140 = vmatpush1.msra.mxu0 0.0
    %141 = vmatprep.subr.mxu0 0.0
    %142 = vmatpush1.msra.mxu0 0.0
    %143 = vmatprep.mubr.f32.mxu0 0.0
    %144 = vmatmul.mubr.f32.gmra.mrb[0].mxu0 %v52
    %v145 = vpop.f32.mrb[0].mxu0
    %v146 = vadd.f32 %v48, %v145
    %v147 = vpop.f32.mrb[0].mxu0
    %148 = vmatprep.mubr.f32.mxu0 0.0
    %149 = vmatmul.mubr.f32.gmra.mrb[0].mxu0 %v55
    %v150 = vpop.f32.mrb[0].mxu0
    %v151 = vadd.f32 %v48, %v150
    %v152 = vpop.f32.mrb[0].mxu0
    %153 = vmatprep.mubr.f32.mxu0 0.0
    %154 = vmatmul.mubr.f32.gmra.mrb[0].mxu0 %v58
    %v155 = vpop.f32.mrb[0].mxu0
    %v156 = vadd.f32 %v48, %v155
    %v157 = vpop.f32.mrb[0].mxu0
    %158 = vmatprep.mubr.f32.mxu0 0.0
    %159 = vmatmul.mubr.f32.gmra.mrb[0].mxu0 %v61
    %v160 = vpop.f32.mrb[0].mxu0
    %v161 = vadd.f32 %v48, %v160
    %v162 = vpop.f32.mrb[0].mxu0
    %163 = vmatprep.mubr.f32.mxu0 0.0
    %164 = vmatmul.mubr.f32.gmra.mrb[0].mxu0 %v64
    %v165 = vpop.f32.mrb[0].mxu0
    %v166 = vadd.f32 %v48, %v165
    %v167 = vpop.f32.mrb[0].mxu0
    %168 = vmatprep.mubr.f32.mxu0 0.0
    %169 = vmatmul.mubr.f32.gmra.mrb[0].mxu0 %v67
    %v170 = vpop.f32.mrb[0].mxu0
    %v171 = vadd.f32 %v48, %v170
    %v172 = vpop.f32.mrb[0].mxu0
    %173 = vmatprep.mubr.f32.mxu0 0.0
    %174 = vmatmul.mubr.f32.gmra.mrb[0].mxu0 %v70
    %v175 = vpop.f32.mrb[0].mxu0
    %v176 = vadd.f32 %v48, %v175
    %v177 = vpop.f32.mrb[0].mxu0
    %178 = vmatprep.mubr.f32.mxu0 0.0
    %179 = vmatmul.mubr.f32.gmra.mrb[0].mxu0 %v73
    %v180 = vpop.f32.mrb[0].mxu0
    %v181 = vadd.f32 %v48, %v180
    %v182 = vpop.f32.mrb[0].mxu0
    %183 = vdwg.mxu0
    %v184 = vmax.f32 %v146, 0.0
    %v185 = vmax.f32 %v151, 0.0
    %v186 = vmax.f32 %v156, 0.0
    %v187 = vmax.f32 %v161, 0.0
    %v188 = vmax.f32 %v166, 0.0
    %v189 = vmax.f32 %v171, 0.0
    %v190 = vmax.f32 %v176, 0.0
    %v191 = vmax.f32 %v181, 0.0
    %v192 = vld [vmem:[%s3] sm:$0x1f]
    %v193 = vld [vmem:[%s5] sm:$0x1]
    %v195 = vlaneseq
    %v196 = vshrl.u32 %v195, 7
    %v197 = vsub.s32 0, %v196
    %v198 = vrot.slane %v193, %v197
    %vm200 = vcmask 39936
    %v202 = vsel %vm200, %v184, 0
    %v205 = vsel %vm200, %v185, 0
    %v208 = vsel %vm200, %v186, 0
    %v211 = vsel %vm200, %v187, 0
    %v214 = vsel %vm200, %v188, 0
    %v217 = vsel %vm200, %v189, 0
    %v220 = vsel %vm200, %v190, 0
    %v223 = vsel %vm200, %v191, 0
    %vm225 = vcmask 1044480
    %v227 = vsel %vm225, %v192, 0
    %229 = vmatprep.subr.mxu0 0.0
    %230 = vmatpush1.msra.mxu0 %v227
    %231 = vmatprep.subr.mxu0 0.0
    %232 = vmatpush1.msra.mxu0 0.0
    %233 = vmatprep.subr.mxu0 0.0
    %234 = vmatpush1.msra.mxu0 0.0
    %235 = vmatprep.subr.mxu0 0.0
    %236 = vmatpush1.msra.mxu0 0.0
    %237 = vmatprep.subr.mxu0 0.0
    %238 = vmatpush1.msra.mxu0 0.0
    %239 = vmatprep.subr.mxu0 0.0
    %240 = vmatpush1.msra.mxu0 0.0
    %241 = vmatprep.subr.mxu0 0.0
    %242 = vmatpush1.msra.mxu0 0.0
    %243 = vmatprep.subr.mxu0 0.0
    %244 = vmatpush1.msra.mxu0 0.0
    %245 = vmatprep.subr.mxu0 0.0
    %246 = vmatpush1.msra.mxu0 0.0
    %247 = vmatprep.subr.mxu0 0.0
    %248 = vmatpush1.msra.mxu0 0.0
    %249 = vmatprep.subr.mxu0 0.0
    %250 = vmatpush1.msra.mxu0 0.0
    %251 = vmatprep.subr.mxu0 0.0
    %252 = vmatpush1.msra.mxu0 0.0
    %253 = vmatprep.subr.mxu0 0.0
    %254 = vmatpush1.msra.mxu0 0.0
    %255 = vmatprep.subr.mxu0 0.0
    %256 = vmatpush1.msra.mxu0 0.0
    %257 = vmatprep.subr.mxu0 0.0
    %258 = vmatpush1.msra.mxu0 0.0
    %259 = vmatprep.subr.mxu0 0.0
    %260 = vmatpush1.msra.mxu0 0.0
    %261 = vmatprep.subr.mxu0 0.0
    %262 = vmatpush1.msra.mxu0 0.0
    %263 = vmatprep.subr.mxu0 0.0
    %264 = vmatpush1.msra.mxu0 0.0
    %265 = vmatprep.subr.mxu0 0.0
    %266 = vmatpush1.msra.mxu0 0.0
    %267 = vmatprep.subr.mxu0 0.0
    %268 = vmatpush1.msra.mxu0 0.0
    %269 = vmatprep.subr.mxu0 0.0
    %270 = vmatpush1.msra.mxu0 0.0
    %271 = vmatprep.subr.mxu0 0.0
    %272 = vmatpush1.msra.mxu0 0.0
    %273 = vmatprep.subr.mxu0 0.0
    %274 = vmatpush1.msra.mxu0 0.0
    %275 = vmatprep.subr.mxu0 0.0
    %276 = vmatpush1.msra.mxu0 0.0
    %277 = vmatprep.subr.mxu0 0.0
    %278 = vmatpush1.msra.mxu0 0.0
    %279 = vmatprep.subr.mxu0 0.0
    %280 = vmatpush1.msra.mxu0 0.0
    %281 = vmatprep.subr.mxu0 0.0
    %282 = vmatpush1.msra.mxu0 0.0
    %283 = vmatprep.subr.mxu0 0.0
    %284 = vmatpush1.msra.mxu0 0.0
    %285 = vmatprep.subr.mxu0 0.0
    %286 = vmatpush1.msra.mxu0 0.0
    %287 = vmatprep.subr.mxu0 0.0
    %288 = vmatpush1.msra.mxu0 0.0
    %289 = vmatprep.subr.mxu0 0.0
    %290 = vmatpush1.msra.mxu0 0.0
    %291 = vmatprep.subr.mxu0 0.0
    %292 = vmatpush1.msra.mxu0 0.0
    %293 = vmatprep.mubr.f32.mxu0 0.0
    %294 = vmatmul.mubr.f32.gmra.mrb[0].mxu0 %v202
    %v295 = vpop.f32.mrb[0].mxu0
    %v296 = vadd.f32 %v198, %v295
    %v297 = vpop.f32.mrb[0].mxu0
    %298 = vmatprep.mubr.f32.mxu0 0.0
    %299 = vmatmul.mubr.f32.gmra.mrb[0].mxu0 %v205
    %v300 = vpop.f32.mrb[0].mxu0
    %v301 = vadd.f32 %v198, %v300
    %v302 = vpop.f32.mrb[0].mxu0
    %303 = vmatprep.mubr.f32.mxu0 0.0
    %304 = vmatmul.mubr.f32.gmra.mrb[0].mxu0 %v208
    %v305 = vpop.f32.mrb[0].mxu0
    %v306 = vadd.f32 %v198, %v305
    %v307 = vpop.f32.mrb[0].mxu0
    %308 = vmatprep.mubr.f32.mxu0 0.0
    %309 = vmatmul.mubr.f32.gmra.mrb[0].mxu0 %v211
    %v310 = vpop.f32.mrb[0].mxu0
    %v311 = vadd.f32 %v198, %v310
    %v312 = vpop.f32.mrb[0].mxu0
    %313 = vmatprep.mubr.f32.mxu0 0.0
    %314 = vmatmul.mubr.f32.gmra.mrb[0].mxu0 %v214
    %v315 = vpop.f32.mrb[0].mxu0
    %v316 = vadd.f32 %v198, %v315
    %v317 = vpop.f32.mrb[0].mxu0
    %318 = vmatprep.mubr.f32.mxu0 0.0
    %319 = vmatmul.mubr.f32.gmra.mrb[0].mxu0 %v217
    %v320 = vpop.f32.mrb[0].mxu0
    %v321 = vadd.f32 %v198, %v320
    %v322 = vpop.f32.mrb[0].mxu0
    %323 = vmatprep.mubr.f32.mxu0 0.0
    %324 = vmatmul.mubr.f32.gmra.mrb[0].mxu0 %v220
    %v325 = vpop.f32.mrb[0].mxu0
    %v326 = vadd.f32 %v198, %v325
    %v327 = vpop.f32.mrb[0].mxu0
    %328 = vmatprep.mubr.f32.mxu0 0.0
    %329 = vmatmul.mubr.f32.gmra.mrb[0].mxu0 %v223
    %v330 = vpop.f32.mrb[0].mxu0
    %v331 = vadd.f32 %v198, %v330
    %v332 = vpop.f32.mrb[0].mxu0
    %333 = vdwg.mxu0
    %v334 = vld [vmem:[%s4] sm:$0xff]
    %v335 = vld [vmem:[%s4 + $0x8] sm:$0x3]
    %v336 = vld [vmem:[%s6] sm:$0x1]
    %v338 = vlaneseq
    %v339 = vshrl.u32 %v338, 7
    %v340 = vsub.s32 0, %v339
    %v341 = vrot.slane %v336, %v340
    %v344 = vsel %vm50, 0.0, 0
    %v347 = vsel %vm75, %v335, 0
    %349 = vmatprep.subr.mxu0 0.0
    %350 = vmatpush1.msra.mxu0 %v334
    %351 = vmatprep.subr.mxu0 0.0
    %352 = vmatpush1.msra.mxu0 %v347
    %353 = vmatprep.subr.mxu0 0.0
    %354 = vmatpush1.msra.mxu0 0.0
    %355 = vmatprep.subr.mxu0 0.0
    %356 = vmatpush1.msra.mxu0 0.0
    %357 = vmatprep.subr.mxu0 0.0
    %358 = vmatpush1.msra.mxu0 0.0
    %359 = vmatprep.subr.mxu0 0.0
    %360 = vmatpush1.msra.mxu0 0.0
    %361 = vmatprep.subr.mxu0 0.0
    %362 = vmatpush1.msra.mxu0 0.0
    %363 = vmatprep.subr.mxu0 0.0
    %364 = vmatpush1.msra.mxu0 0.0
    %365 = vmatprep.subr.mxu0 0.0
    %366 = vmatpush1.msra.mxu0 0.0
    %367 = vmatprep.subr.mxu0 0.0
    %368 = vmatpush1.msra.mxu0 0.0
    %369 = vmatprep.subr.mxu0 0.0
    %370 = vmatpush1.msra.mxu0 0.0
    %371 = vmatprep.subr.mxu0 0.0
    %372 = vmatpush1.msra.mxu0 0.0
    %373 = vmatprep.subr.mxu0 0.0
    %374 = vmatpush1.msra.mxu0 0.0
    %375 = vmatprep.subr.mxu0 0.0
    %376 = vmatpush1.msra.mxu0 0.0
    %377 = vmatprep.subr.mxu0 0.0
    %378 = vmatpush1.msra.mxu0 0.0
    %379 = vmatprep.subr.mxu0 0.0
    %380 = vmatpush1.msra.mxu0 0.0
    %381 = vmatprep.subr.mxu0 0.0
    %382 = vmatpush1.msra.mxu0 0.0
    %383 = vmatprep.subr.mxu0 0.0
    %384 = vmatpush1.msra.mxu0 0.0
    %385 = vmatprep.subr.mxu0 0.0
    %386 = vmatpush1.msra.mxu0 0.0
    %387 = vmatprep.subr.mxu0 0.0
    %388 = vmatpush1.msra.mxu0 0.0
    %389 = vmatprep.subr.mxu0 0.0
    %390 = vmatpush1.msra.mxu0 0.0
    %391 = vmatprep.subr.mxu0 0.0
    %392 = vmatpush1.msra.mxu0 0.0
    %393 = vmatprep.subr.mxu0 0.0
    %394 = vmatpush1.msra.mxu0 0.0
    %395 = vmatprep.subr.mxu0 0.0
    %396 = vmatpush1.msra.mxu0 0.0
    %397 = vmatprep.subr.mxu0 0.0
    %398 = vmatpush1.msra.mxu0 0.0
    %399 = vmatprep.subr.mxu0 0.0
    %400 = vmatpush1.msra.mxu0 0.0
    %401 = vmatprep.subr.mxu0 0.0
    %402 = vmatpush1.msra.mxu0 0.0
    %403 = vmatprep.subr.mxu0 0.0
    %404 = vmatpush1.msra.mxu0 0.0
    %405 = vmatprep.subr.mxu0 0.0
    %406 = vmatpush1.msra.mxu0 0.0
    %407 = vmatprep.subr.mxu0 0.0
    %408 = vmatpush1.msra.mxu0 0.0
    %409 = vmatprep.subr.mxu0 0.0
    %410 = vmatpush1.msra.mxu0 0.0
    %411 = vmatprep.subr.mxu0 0.0
    %412 = vmatpush1.msra.mxu0 0.0
    %413 = vmatprep.mubr.f32.mxu0 0.0
    %414 = vmatmul.mubr.f32.gmra.mrb[0].mxu0 %v344
    %v415 = vpop.f32.mrb[0].mxu0
    %v416 = vadd.f32 %v341, %v415
    %v417 = vpop.f32.mrb[0].mxu0
    %418 = vdwg.mxu0
    %v419 = vadd.f32 %v296, %v416
    %v420 = vxor.u32 %v419, 2147483648
    %v421 = vmul.f32 %v420, 1.442695
    %v422 = vpow.pop %v421
    %v423 = vadd.f32 %v422, 1.0
    %v424 = vrcp.pop %v423
    %v425 = vmul.f32 1.0, %v424
    %427 = vrot.lane.b32.xlu0 %v416, 108
    %v428 = vpop.permute.xlu0 %427
    %v430 = vmul.f32 %v425, %v428
    %432 = vrot.lane.b32.xlu0 %v430, 20
    %v433 = vpop.permute.xlu0 %432
    %v435 = vadd.f32 %v296, %v433
    %v436 = vtanh.pop %v435
    %v437 = vsub.f32 1.0, %v425
    %439 = vrot.lane.b32.xlu0 %v436, 118
    %v440 = vpop.permute.xlu0 %439
    %v442 = vmul.f32 %v437, %v440
    %v443 = vmul.f32 %v425, 0.0
    %v444 = vadd.f32 %v442, %v443
    %446 = vrot.lane.b32.xlu0 %v444, 118
    %v447 = vpop.permute.xlu0 %446
    %v448 = vsel %vm50, %v447, 0
    %450 = vmatprep.subr.mxu0 0.0
    %451 = vmatpush1.msra.mxu0 %v334
    %452 = vmatprep.subr.mxu0 0.0
    %453 = vmatpush1.msra.mxu0 %v347
    %454 = vmatprep.subr.mxu0 0.0
    %455 = vmatpush1.msra.mxu0 0.0
    %456 = vmatprep.subr.mxu0 0.0
    %457 = vmatpush1.msra.mxu0 0.0
    %458 = vmatprep.subr.mxu0 0.0
    %459 = vmatpush1.msra.mxu0 0.0
    %460 = vmatprep.subr.mxu0 0.0
    %461 = vmatpush1.msra.mxu0 0.0
    %462 = vmatprep.subr.mxu0 0.0
    %463 = vmatpush1.msra.mxu0 0.0
    %464 = vmatprep.subr.mxu0 0.0
    %465 = vmatpush1.msra.mxu0 0.0
    %466 = vmatprep.subr.mxu0 0.0
    %467 = vmatpush1.msra.mxu0 0.0
    %468 = vmatprep.subr.mxu0 0.0
    %469 = vmatpush1.msra.mxu0 0.0
    %470 = vmatprep.subr.mxu0 0.0
    %471 = vmatpush1.msra.mxu0 0.0
    %472 = vmatprep.subr.mxu0 0.0
    %473 = vmatpush1.msra.mxu0 0.0
    %474 = vmatprep.subr.mxu0 0.0
    %475 = vmatpush1.msra.mxu0 0.0
    %476 = vmatprep.subr.mxu0 0.0
    %477 = vmatpush1.msra.mxu0 0.0
    %478 = vmatprep.subr.mxu0 0.0
    %479 = vmatpush1.msra.mxu0 0.0
    %480 = vmatprep.subr.mxu0 0.0
    %481 = vmatpush1.msra.mxu0 0.0
    %482 = vmatprep.subr.mxu0 0.0
    %483 = vmatpush1.msra.mxu0 0.0
    %484 = vmatprep.subr.mxu0 0.0
    %485 = vmatpush1.msra.mxu0 0.0
    %486 = vmatprep.subr.mxu0 0.0
    %487 = vmatpush1.msra.mxu0 0.0
    %488 = vmatprep.subr.mxu0 0.0
    %489 = vmatpush1.msra.mxu0 0.0
    %490 = vmatprep.subr.mxu0 0.0
    %491 = vmatpush1.msra.mxu0 0.0
    %492 = vmatprep.subr.mxu0 0.0
    %493 = vmatpush1.msra.mxu0 0.0
    %494 = vmatprep.subr.mxu0 0.0
    %495 = vmatpush1.msra.mxu0 0.0
    %496 = vmatprep.subr.mxu0 0.0
    %497 = vmatpush1.msra.mxu0 0.0
    %498 = vmatprep.subr.mxu0 0.0
    %499 = vmatpush1.msra.mxu0 0.0
    %500 = vmatprep.subr.mxu0 0.0
    %501 = vmatpush1.msra.mxu0 0.0
    %502 = vmatprep.subr.mxu0 0.0
    %503 = vmatpush1.msra.mxu0 0.0
    %504 = vmatprep.subr.mxu0 0.0
    %505 = vmatpush1.msra.mxu0 0.0
    %506 = vmatprep.subr.mxu0 0.0
    %507 = vmatpush1.msra.mxu0 0.0
    %508 = vmatprep.subr.mxu0 0.0
    %509 = vmatpush1.msra.mxu0 0.0
    %510 = vmatprep.subr.mxu0 0.0
    %511 = vmatpush1.msra.mxu0 0.0
    %512 = vmatprep.subr.mxu0 0.0
    %513 = vmatpush1.msra.mxu0 0.0
    %514 = vmatprep.mubr.f32.mxu0 0.0
    %515 = vmatmul.mubr.f32.gmra.mrb[0].mxu0 %v448
    %v516 = vpop.f32.mrb[0].mxu0
    %v517 = vadd.f32 %v341, %v516
    %v518 = vpop.f32.mrb[0].mxu0
    %519 = vdwg.mxu0
    %v520 = vadd.f32 %v301, %v517
    %v521 = vxor.u32 %v520, 2147483648
    %v522 = vmul.f32 %v521, 1.442695
    %v523 = vpow.pop %v522
    %v524 = vadd.f32 %v523, 1.0
    %v525 = vrcp.pop %v524
    %v526 = vmul.f32 1.0, %v525
    %528 = vrot.lane.b32.xlu0 %v517, 108
    %v529 = vpop.permute.xlu0 %528
    %v531 = vmul.f32 %v526, %v529
    %533 = vrot.lane.b32.xlu0 %v531, 20
    %v534 = vpop.permute.xlu0 %533
    %v536 = vadd.f32 %v301, %v534
    %v537 = vtanh.pop %v536
    %v538 = vsub.f32 1.0, %v526
    %540 = vrot.lane.b32.xlu0 %v537, 118
    %v541 = vpop.permute.xlu0 %540
    %v543 = vmul.f32 %v538, %v541
    %v544 = vmul.f32 %v526, %v444
    %v545 = vadd.f32 %v543, %v544
    %547 = vrot.lane.b32.xlu0 %v545, 118
    %v548 = vpop.permute.xlu0 %547
    %v549 = vsel %vm50, %v548, 0
    %551 = vmatprep.subr.mxu0 0.0
    %552 = vmatpush1.msra.mxu0 %v334
    %553 = vmatprep.subr.mxu0 0.0
    %554 = vmatpush1.msra.mxu0 %v347
    %555 = vmatprep.subr.mxu0 0.0
    %556 = vmatpush1.msra.mxu0 0.0
    %557 = vmatprep.subr.mxu0 0.0
    %558 = vmatpush1.msra.mxu0 0.0
    %559 = vmatprep.subr.mxu0 0.0
    %560 = vmatpush1.msra.mxu0 0.0
    %561 = vmatprep.subr.mxu0 0.0
    %562 = vmatpush1.msra.mxu0 0.0
    %563 = vmatprep.subr.mxu0 0.0
    %564 = vmatpush1.msra.mxu0 0.0
    %565 = vmatprep.subr.mxu0 0.0
    %566 = vmatpush1.msra.mxu0 0.0
    %567 = vmatprep.subr.mxu0 0.0
    %568 = vmatpush1.msra.mxu0 0.0
    %569 = vmatprep.subr.mxu0 0.0
    %570 = vmatpush1.msra.mxu0 0.0
    %571 = vmatprep.subr.mxu0 0.0
    %572 = vmatpush1.msra.mxu0 0.0
    %573 = vmatprep.subr.mxu0 0.0
    %574 = vmatpush1.msra.mxu0 0.0
    %575 = vmatprep.subr.mxu0 0.0
    %576 = vmatpush1.msra.mxu0 0.0
    %577 = vmatprep.subr.mxu0 0.0
    %578 = vmatpush1.msra.mxu0 0.0
    %579 = vmatprep.subr.mxu0 0.0
    %580 = vmatpush1.msra.mxu0 0.0
    %581 = vmatprep.subr.mxu0 0.0
    %582 = vmatpush1.msra.mxu0 0.0
    %583 = vmatprep.subr.mxu0 0.0
    %584 = vmatpush1.msra.mxu0 0.0
    %585 = vmatprep.subr.mxu0 0.0
    %586 = vmatpush1.msra.mxu0 0.0
    %587 = vmatprep.subr.mxu0 0.0
    %588 = vmatpush1.msra.mxu0 0.0
    %589 = vmatprep.subr.mxu0 0.0
    %590 = vmatpush1.msra.mxu0 0.0
    %591 = vmatprep.subr.mxu0 0.0
    %592 = vmatpush1.msra.mxu0 0.0
    %593 = vmatprep.subr.mxu0 0.0
    %594 = vmatpush1.msra.mxu0 0.0
    %595 = vmatprep.subr.mxu0 0.0
    %596 = vmatpush1.msra.mxu0 0.0
    %597 = vmatprep.subr.mxu0 0.0
    %598 = vmatpush1.msra.mxu0 0.0
    %599 = vmatprep.subr.mxu0 0.0
    %600 = vmatpush1.msra.mxu0 0.0
    %601 = vmatprep.subr.mxu0 0.0
    %602 = vmatpush1.msra.mxu0 0.0
    %603 = vmatprep.subr.mxu0 0.0
    %604 = vmatpush1.msra.mxu0 0.0
    %605 = vmatprep.subr.mxu0 0.0
    %606 = vmatpush1.msra.mxu0 0.0
    %607 = vmatprep.subr.mxu0 0.0
    %608 = vmatpush1.msra.mxu0 0.0
    %609 = vmatprep.subr.mxu0 0.0
    %610 = vmatpush1.msra.mxu0 0.0
    %611 = vmatprep.subr.mxu0 0.0
    %612 = vmatpush1.msra.mxu0 0.0
    %613 = vmatprep.subr.mxu0 0.0
    %614 = vmatpush1.msra.mxu0 0.0
    %615 = vmatprep.mubr.f32.mxu0 0.0
    %616 = vmatmul.mubr.f32.gmra.mrb[0].mxu0 %v549
    %v617 = vpop.f32.mrb[0].mxu0
    %v618 = vadd.f32 %v341, %v617
    %v619 = vpop.f32.mrb[0].mxu0
    %620 = vdwg.mxu0
    %v621 = vadd.f32 %v306, %v618
    %v622 = vxor.u32 %v621, 2147483648
    %v623 = vmul.f32 %v622, 1.442695
    %v624 = vpow.pop %v623
    %v625 = vadd.f32 %v624, 1.0
    %v626 = vrcp.pop %v625
    %v627 = vmul.f32 1.0, %v626
    %629 = vrot.lane.b32.xlu0 %v618, 108
    %v630 = vpop.permute.xlu0 %629
    %v632 = vmul.f32 %v627, %v630
    %634 = vrot.lane.b32.xlu0 %v632, 20
    %v635 = vpop.permute.xlu0 %634
    %v637 = vadd.f32 %v306, %v635
    %v638 = vtanh.pop %v637
    %v639 = vsub.f32 1.0, %v627
    %641 = vrot.lane.b32.xlu0 %v638, 118
    %v642 = vpop.permute.xlu0 %641
    %v644 = vmul.f32 %v639, %v642
    %v645 = vmul.f32 %v627, %v545
    %v646 = vadd.f32 %v644, %v645
    %648 = vrot.lane.b32.xlu0 %v646, 118
    %v649 = vpop.permute.xlu0 %648
    %v650 = vsel %vm50, %v649, 0
    %652 = vmatprep.subr.mxu0 0.0
    %653 = vmatpush1.msra.mxu0 %v334
    %654 = vmatprep.subr.mxu0 0.0
    %655 = vmatpush1.msra.mxu0 %v347
    %656 = vmatprep.subr.mxu0 0.0
    %657 = vmatpush1.msra.mxu0 0.0
    %658 = vmatprep.subr.mxu0 0.0
    %659 = vmatpush1.msra.mxu0 0.0
    %660 = vmatprep.subr.mxu0 0.0
    %661 = vmatpush1.msra.mxu0 0.0
    %662 = vmatprep.subr.mxu0 0.0
    %663 = vmatpush1.msra.mxu0 0.0
    %664 = vmatprep.subr.mxu0 0.0
    %665 = vmatpush1.msra.mxu0 0.0
    %666 = vmatprep.subr.mxu0 0.0
    %667 = vmatpush1.msra.mxu0 0.0
    %668 = vmatprep.subr.mxu0 0.0
    %669 = vmatpush1.msra.mxu0 0.0
    %670 = vmatprep.subr.mxu0 0.0
    %671 = vmatpush1.msra.mxu0 0.0
    %672 = vmatprep.subr.mxu0 0.0
    %673 = vmatpush1.msra.mxu0 0.0
    %674 = vmatprep.subr.mxu0 0.0
    %675 = vmatpush1.msra.mxu0 0.0
    %676 = vmatprep.subr.mxu0 0.0
    %677 = vmatpush1.msra.mxu0 0.0
    %678 = vmatprep.subr.mxu0 0.0
    %679 = vmatpush1.msra.mxu0 0.0
    %680 = vmatprep.subr.mxu0 0.0
    %681 = vmatpush1.msra.mxu0 0.0
    %682 = vmatprep.subr.mxu0 0.0
    %683 = vmatpush1.msra.mxu0 0.0
    %684 = vmatprep.subr.mxu0 0.0
    %685 = vmatpush1.msra.mxu0 0.0
    %686 = vmatprep.subr.mxu0 0.0
    %687 = vmatpush1.msra.mxu0 0.0
    %688 = vmatprep.subr.mxu0 0.0
    %689 = vmatpush1.msra.mxu0 0.0
    %690 = vmatprep.subr.mxu0 0.0
    %691 = vmatpush1.msra.mxu0 0.0
    %692 = vmatprep.subr.mxu0 0.0
    %693 = vmatpush1.msra.mxu0 0.0
    %694 = vmatprep.subr.mxu0 0.0
    %695 = vmatpush1.msra.mxu0 0.0
    %696 = vmatprep.subr.mxu0 0.0
    %697 = vmatpush1.msra.mxu0 0.0
    %698 = vmatprep.subr.mxu0 0.0
    %699 = vmatpush1.msra.mxu0 0.0
    %700 = vmatprep.subr.mxu0 0.0
    %701 = vmatpush1.msra.mxu0 0.0
    %702 = vmatprep.subr.mxu0 0.0
    %703 = vmatpush1.msra.mxu0 0.0
    %704 = vmatprep.subr.mxu0 0.0
    %705 = vmatpush1.msra.mxu0 0.0
    %706 = vmatprep.subr.mxu0 0.0
    %707 = vmatpush1.msra.mxu0 0.0
    %708 = vmatprep.subr.mxu0 0.0
    %709 = vmatpush1.msra.mxu0 0.0
    %710 = vmatprep.subr.mxu0 0.0
    %711 = vmatpush1.msra.mxu0 0.0
    %712 = vmatprep.subr.mxu0 0.0
    %713 = vmatpush1.msra.mxu0 0.0
    %714 = vmatprep.subr.mxu0 0.0
    %715 = vmatpush1.msra.mxu0 0.0
    %716 = vmatprep.mubr.f32.mxu0 0.0
    %717 = vmatmul.mubr.f32.gmra.mrb[0].mxu0 %v650
    %v718 = vpop.f32.mrb[0].mxu0
    %v719 = vadd.f32 %v341, %v718
    %v720 = vpop.f32.mrb[0].mxu0
    %721 = vdwg.mxu0
    %v722 = vadd.f32 %v311, %v719
    %v723 = vxor.u32 %v722, 2147483648
    %v724 = vmul.f32 %v723, 1.442695
    %v725 = vpow.pop %v724
    %v726 = vadd.f32 %v725, 1.0
    %v727 = vrcp.pop %v726
    %v728 = vmul.f32 1.0, %v727
    %730 = vrot.lane.b32.xlu0 %v719, 108
    %v731 = vpop.permute.xlu0 %730
    %v733 = vmul.f32 %v728, %v731
    %735 = vrot.lane.b32.xlu0 %v733, 20
    %v736 = vpop.permute.xlu0 %735
    %v738 = vadd.f32 %v311, %v736
    %v739 = vtanh.pop %v738
    %v740 = vsub.f32 1.0, %v728
    %742 = vrot.lane.b32.xlu0 %v739, 118
    %v743 = vpop.permute.xlu0 %742
    %v745 = vmul.f32 %v740, %v743
    %v746 = vmul.f32 %v728, %v646
    %v747 = vadd.f32 %v745, %v746
    %749 = vrot.lane.b32.xlu0 %v747, 118
    %v750 = vpop.permute.xlu0 %749
    %v751 = vsel %vm50, %v750, 0
    %753 = vmatprep.subr.mxu0 0.0
    %754 = vmatpush1.msra.mxu0 %v334
    %755 = vmatprep.subr.mxu0 0.0
    %756 = vmatpush1.msra.mxu0 %v347
    %757 = vmatprep.subr.mxu0 0.0
    %758 = vmatpush1.msra.mxu0 0.0
    %759 = vmatprep.subr.mxu0 0.0
    %760 = vmatpush1.msra.mxu0 0.0
    %761 = vmatprep.subr.mxu0 0.0
    %762 = vmatpush1.msra.mxu0 0.0
    %763 = vmatprep.subr.mxu0 0.0
    %764 = vmatpush1.msra.mxu0 0.0
    %765 = vmatprep.subr.mxu0 0.0
    %766 = vmatpush1.msra.mxu0 0.0
    %767 = vmatprep.subr.mxu0 0.0
    %768 = vmatpush1.msra.mxu0 0.0
    %769 = vmatprep.subr.mxu0 0.0
    %770 = vmatpush1.msra.mxu0 0.0
    %771 = vmatprep.subr.mxu0 0.0
    %772 = vmatpush1.msra.mxu0 0.0
    %773 = vmatprep.subr.mxu0 0.0
    %774 = vmatpush1.msra.mxu0 0.0
    %775 = vmatprep.subr.mxu0 0.0
    %776 = vmatpush1.msra.mxu0 0.0
    %777 = vmatprep.subr.mxu0 0.0
    %778 = vmatpush1.msra.mxu0 0.0
    %779 = vmatprep.subr.mxu0 0.0
    %780 = vmatpush1.msra.mxu0 0.0
    %781 = vmatprep.subr.mxu0 0.0
    %782 = vmatpush1.msra.mxu0 0.0
    %783 = vmatprep.subr.mxu0 0.0
    %784 = vmatpush1.msra.mxu0 0.0
    %785 = vmatprep.subr.mxu0 0.0
    %786 = vmatpush1.msra.mxu0 0.0
    %787 = vmatprep.subr.mxu0 0.0
    %788 = vmatpush1.msra.mxu0 0.0
    %789 = vmatprep.subr.mxu0 0.0
    %790 = vmatpush1.msra.mxu0 0.0
    %791 = vmatprep.subr.mxu0 0.0
    %792 = vmatpush1.msra.mxu0 0.0
    %793 = vmatprep.subr.mxu0 0.0
    %794 = vmatpush1.msra.mxu0 0.0
    %795 = vmatprep.subr.mxu0 0.0
    %796 = vmatpush1.msra.mxu0 0.0
    %797 = vmatprep.subr.mxu0 0.0
    %798 = vmatpush1.msra.mxu0 0.0
    %799 = vmatprep.subr.mxu0 0.0
    %800 = vmatpush1.msra.mxu0 0.0
    %801 = vmatprep.subr.mxu0 0.0
    %802 = vmatpush1.msra.mxu0 0.0
    %803 = vmatprep.subr.mxu0 0.0
    %804 = vmatpush1.msra.mxu0 0.0
    %805 = vmatprep.subr.mxu0 0.0
    %806 = vmatpush1.msra.mxu0 0.0
    %807 = vmatprep.subr.mxu0 0.0
    %808 = vmatpush1.msra.mxu0 0.0
    %809 = vmatprep.subr.mxu0 0.0
    %810 = vmatpush1.msra.mxu0 0.0
    %811 = vmatprep.subr.mxu0 0.0
    %812 = vmatpush1.msra.mxu0 0.0
    %813 = vmatprep.subr.mxu0 0.0
    %814 = vmatpush1.msra.mxu0 0.0
    %815 = vmatprep.subr.mxu0 0.0
    %816 = vmatpush1.msra.mxu0 0.0
    %817 = vmatprep.mubr.f32.mxu0 0.0
    %818 = vmatmul.mubr.f32.gmra.mrb[0].mxu0 %v751
    %v819 = vpop.f32.mrb[0].mxu0
    %v820 = vadd.f32 %v341, %v819
    %v821 = vpop.f32.mrb[0].mxu0
    %822 = vdwg.mxu0
    %v823 = vadd.f32 %v316, %v820
    %v824 = vxor.u32 %v823, 2147483648
    %v825 = vmul.f32 %v824, 1.442695
    %v826 = vpow.pop %v825
    %v827 = vadd.f32 %v826, 1.0
    %v828 = vrcp.pop %v827
    %v829 = vmul.f32 1.0, %v828
    %831 = vrot.lane.b32.xlu0 %v820, 108
    %v832 = vpop.permute.xlu0 %831
    %v834 = vmul.f32 %v829, %v832
    %836 = vrot.lane.b32.xlu0 %v834, 20
    %v837 = vpop.permute.xlu0 %836
    %v839 = vadd.f32 %v316, %v837
    %v840 = vtanh.pop %v839
    %v841 = vsub.f32 1.0, %v829
    %843 = vrot.lane.b32.xlu0 %v840, 118
    %v844 = vpop.permute.xlu0 %843
    %v846 = vmul.f32 %v841, %v844
    %v847 = vmul.f32 %v829, %v747
    %v848 = vadd.f32 %v846, %v847
    %850 = vrot.lane.b32.xlu0 %v848, 118
    %v851 = vpop.permute.xlu0 %850
    %v852 = vsel %vm50, %v851, 0
    %854 = vmatprep.subr.mxu0 0.0
    %855 = vmatpush1.msra.mxu0 %v334
    %856 = vmatprep.subr.mxu0 0.0
    %857 = vmatpush1.msra.mxu0 %v347
    %858 = vmatprep.subr.mxu0 0.0
    %859 = vmatpush1.msra.mxu0 0.0
    %860 = vmatprep.subr.mxu0 0.0
    %861 = vmatpush1.msra.mxu0 0.0
    %862 = vmatprep.subr.mxu0 0.0
    %863 = vmatpush1.msra.mxu0 0.0
    %864 = vmatprep.subr.mxu0 0.0
    %865 = vmatpush1.msra.mxu0 0.0
    %866 = vmatprep.subr.mxu0 0.0
    %867 = vmatpush1.msra.mxu0 0.0
    %868 = vmatprep.subr.mxu0 0.0
    %869 = vmatpush1.msra.mxu0 0.0
    %870 = vmatprep.subr.mxu0 0.0
    %871 = vmatpush1.msra.mxu0 0.0
    %872 = vmatprep.subr.mxu0 0.0
    %873 = vmatpush1.msra.mxu0 0.0
    %874 = vmatprep.subr.mxu0 0.0
    %875 = vmatpush1.msra.mxu0 0.0
    %876 = vmatprep.subr.mxu0 0.0
    %877 = vmatpush1.msra.mxu0 0.0
    %878 = vmatprep.subr.mxu0 0.0
    %879 = vmatpush1.msra.mxu0 0.0
    %880 = vmatprep.subr.mxu0 0.0
    %881 = vmatpush1.msra.mxu0 0.0
    %882 = vmatprep.subr.mxu0 0.0
    %883 = vmatpush1.msra.mxu0 0.0
    %884 = vmatprep.subr.mxu0 0.0
    %885 = vmatpush1.msra.mxu0 0.0
    %886 = vmatprep.subr.mxu0 0.0
    %887 = vmatpush1.msra.mxu0 0.0
    %888 = vmatprep.subr.mxu0 0.0
    %889 = vmatpush1.msra.mxu0 0.0
    %890 = vmatprep.subr.mxu0 0.0
    %891 = vmatpush1.msra.mxu0 0.0
    %892 = vmatprep.subr.mxu0 0.0
    %893 = vmatpush1.msra.mxu0 0.0
    %894 = vmatprep.subr.mxu0 0.0
    %895 = vmatpush1.msra.mxu0 0.0
    %896 = vmatprep.subr.mxu0 0.0
    %897 = vmatpush1.msra.mxu0 0.0
    %898 = vmatprep.subr.mxu0 0.0
    %899 = vmatpush1.msra.mxu0 0.0
    %900 = vmatprep.subr.mxu0 0.0
    %901 = vmatpush1.msra.mxu0 0.0
    %902 = vmatprep.subr.mxu0 0.0
    %903 = vmatpush1.msra.mxu0 0.0
    %904 = vmatprep.subr.mxu0 0.0
    %905 = vmatpush1.msra.mxu0 0.0
    %906 = vmatprep.subr.mxu0 0.0
    %907 = vmatpush1.msra.mxu0 0.0
    %908 = vmatprep.subr.mxu0 0.0
    %909 = vmatpush1.msra.mxu0 0.0
    %910 = vmatprep.subr.mxu0 0.0
    %911 = vmatpush1.msra.mxu0 0.0
    %912 = vmatprep.subr.mxu0 0.0
    %913 = vmatpush1.msra.mxu0 0.0
    %914 = vmatprep.subr.mxu0 0.0
    %915 = vmatpush1.msra.mxu0 0.0
    %916 = vmatprep.subr.mxu0 0.0
    %917 = vmatpush1.msra.mxu0 0.0
    %918 = vmatprep.mubr.f32.mxu0 0.0
    %919 = vmatmul.mubr.f32.gmra.mrb[0].mxu0 %v852
    %v920 = vpop.f32.mrb[0].mxu0
    %v921 = vadd.f32 %v341, %v920
    %v922 = vpop.f32.mrb[0].mxu0
    %923 = vdwg.mxu0
    %v924 = vadd.f32 %v321, %v921
    %v925 = vxor.u32 %v924, 2147483648
    %v926 = vmul.f32 %v925, 1.442695
    %v927 = vpow.pop %v926
    %v928 = vadd.f32 %v927, 1.0
    %v929 = vrcp.pop %v928
    %v930 = vmul.f32 1.0, %v929
    %932 = vrot.lane.b32.xlu0 %v921, 108
    %v933 = vpop.permute.xlu0 %932
    %v935 = vmul.f32 %v930, %v933
    %937 = vrot.lane.b32.xlu0 %v935, 20
    %v938 = vpop.permute.xlu0 %937
    %v940 = vadd.f32 %v321, %v938
    %v941 = vtanh.pop %v940
    %v942 = vsub.f32 1.0, %v930
    %944 = vrot.lane.b32.xlu0 %v941, 118
    %v945 = vpop.permute.xlu0 %944
    %v947 = vmul.f32 %v942, %v945
    %v948 = vmul.f32 %v930, %v848
    %v949 = vadd.f32 %v947, %v948
    %951 = vrot.lane.b32.xlu0 %v949, 118
    %v952 = vpop.permute.xlu0 %951
    %v953 = vsel %vm50, %v952, 0
    %955 = vmatprep.subr.mxu0 0.0
    %956 = vmatpush1.msra.mxu0 %v334
    %957 = vmatprep.subr.mxu0 0.0
    %958 = vmatpush1.msra.mxu0 %v347
    %959 = vmatprep.subr.mxu0 0.0
    %960 = vmatpush1.msra.mxu0 0.0
    %961 = vmatprep.subr.mxu0 0.0
    %962 = vmatpush1.msra.mxu0 0.0
    %963 = vmatprep.subr.mxu0 0.0
    %964 = vmatpush1.msra.mxu0 0.0
    %965 = vmatprep.subr.mxu0 0.0
    %966 = vmatpush1.msra.mxu0 0.0
    %967 = vmatprep.subr.mxu0 0.0
    %968 = vmatpush1.msra.mxu0 0.0
    %969 = vmatprep.subr.mxu0 0.0
    %970 = vmatpush1.msra.mxu0 0.0
    %971 = vmatprep.subr.mxu0 0.0
    %972 = vmatpush1.msra.mxu0 0.0
    %973 = vmatprep.subr.mxu0 0.0
    %974 = vmatpush1.msra.mxu0 0.0
    %975 = vmatprep.subr.mxu0 0.0
    %976 = vmatpush1.msra.mxu0 0.0
    %977 = vmatprep.subr.mxu0 0.0
    %978 = vmatpush1.msra.mxu0 0.0
    %979 = vmatprep.subr.mxu0 0.0
    %980 = vmatpush1.msra.mxu0 0.0
    %981 = vmatprep.subr.mxu0 0.0
    %982 = vmatpush1.msra.mxu0 0.0
    %983 = vmatprep.subr.mxu0 0.0
    %984 = vmatpush1.msra.mxu0 0.0
    %985 = vmatprep.subr.mxu0 0.0
    %986 = vmatpush1.msra.mxu0 0.0
    %987 = vmatprep.subr.mxu0 0.0
    %988 = vmatpush1.msra.mxu0 0.0
    %989 = vmatprep.subr.mxu0 0.0
    %990 = vmatpush1.msra.mxu0 0.0
    %991 = vmatprep.subr.mxu0 0.0
    %992 = vmatpush1.msra.mxu0 0.0
    %993 = vmatprep.subr.mxu0 0.0
    %994 = vmatpush1.msra.mxu0 0.0
    %995 = vmatprep.subr.mxu0 0.0
    %996 = vmatpush1.msra.mxu0 0.0
    %997 = vmatprep.subr.mxu0 0.0
    %998 = vmatpush1.msra.mxu0 0.0
    %999 = vmatprep.subr.mxu0 0.0
    %1000 = vmatpush1.msra.mxu0 0.0
    %1001 = vmatprep.subr.mxu0 0.0
    %1002 = vmatpush1.msra.mxu0 0.0
    %1003 = vmatprep.subr.mxu0 0.0
    %1004 = vmatpush1.msra.mxu0 0.0
    %1005 = vmatprep.subr.mxu0 0.0
    %1006 = vmatpush1.msra.mxu0 0.0
    %1007 = vmatprep.subr.mxu0 0.0
    %1008 = vmatpush1.msra.mxu0 0.0
    %1009 = vmatprep.subr.mxu0 0.0
    %1010 = vmatpush1.msra.mxu0 0.0
    %1011 = vmatprep.subr.mxu0 0.0
    %1012 = vmatpush1.msra.mxu0 0.0
    %1013 = vmatprep.subr.mxu0 0.0
    %1014 = vmatpush1.msra.mxu0 0.0
    %1015 = vmatprep.subr.mxu0 0.0
    %1016 = vmatpush1.msra.mxu0 0.0
    %1017 = vmatprep.subr.mxu0 0.0
    %1018 = vmatpush1.msra.mxu0 0.0
    %1019 = vmatprep.mubr.f32.mxu0 0.0
    %1020 = vmatmul.mubr.f32.gmra.mrb[0].mxu0 %v953
    %v1021 = vpop.f32.mrb[0].mxu0
    %v1022 = vadd.f32 %v341, %v1021
    %v1023 = vpop.f32.mrb[0].mxu0
    %1024 = vdwg.mxu0
    %v1025 = vadd.f32 %v326, %v1022
    %v1026 = vxor.u32 %v1025, 2147483648
    %v1027 = vmul.f32 %v1026, 1.442695
    %v1028 = vpow.pop %v1027
    %v1029 = vadd.f32 %v1028, 1.0
    %v1030 = vrcp.pop %v1029
    %v1031 = vmul.f32 1.0, %v1030
    %1033 = vrot.lane.b32.xlu0 %v1022, 108
    %v1034 = vpop.permute.xlu0 %1033
    %v1036 = vmul.f32 %v1031, %v1034
    %1038 = vrot.lane.b32.xlu0 %v1036, 20
    %v1039 = vpop.permute.xlu0 %1038
    %v1041 = vadd.f32 %v326, %v1039
    %v1042 = vtanh.pop %v1041
    %v1043 = vsub.f32 1.0, %v1031
    %1045 = vrot.lane.b32.xlu0 %v1042, 118
    %v1046 = vpop.permute.xlu0 %1045
    %v1048 = vmul.f32 %v1043, %v1046
    %v1049 = vmul.f32 %v1031, %v949
    %v1050 = vadd.f32 %v1048, %v1049
    %1052 = vrot.lane.b32.xlu0 %v1050, 118
    %v1053 = vpop.permute.xlu0 %1052
    %v1054 = vsel %vm50, %v1053, 0
    %1056 = vmatprep.subr.mxu0 0.0
    %1057 = vmatpush1.msra.mxu0 %v334
    %1058 = vmatprep.subr.mxu0 0.0
    %1059 = vmatpush1.msra.mxu0 %v347
    %1060 = vmatprep.subr.mxu0 0.0
    %1061 = vmatpush1.msra.mxu0 0.0
    %1062 = vmatprep.subr.mxu0 0.0
    %1063 = vmatpush1.msra.mxu0 0.0
    %1064 = vmatprep.subr.mxu0 0.0
    %1065 = vmatpush1.msra.mxu0 0.0
    %1066 = vmatprep.subr.mxu0 0.0
    %1067 = vmatpush1.msra.mxu0 0.0
    %1068 = vmatprep.subr.mxu0 0.0
    %1069 = vmatpush1.msra.mxu0 0.0
    %1070 = vmatprep.subr.mxu0 0.0
    %1071 = vmatpush1.msra.mxu0 0.0
    %1072 = vmatprep.subr.mxu0 0.0
    %1073 = vmatpush1.msra.mxu0 0.0
    %1074 = vmatprep.subr.mxu0 0.0
    %1075 = vmatpush1.msra.mxu0 0.0
    %1076 = vmatprep.subr.mxu0 0.0
    %1077 = vmatpush1.msra.mxu0 0.0
    %1078 = vmatprep.subr.mxu0 0.0
    %1079 = vmatpush1.msra.mxu0 0.0
    %1080 = vmatprep.subr.mxu0 0.0
    %1081 = vmatpush1.msra.mxu0 0.0
    %1082 = vmatprep.subr.mxu0 0.0
    %1083 = vmatpush1.msra.mxu0 0.0
    %1084 = vmatprep.subr.mxu0 0.0
    %1085 = vmatpush1.msra.mxu0 0.0
    %1086 = vmatprep.subr.mxu0 0.0
    %1087 = vmatpush1.msra.mxu0 0.0
    %1088 = vmatprep.subr.mxu0 0.0
    %1089 = vmatpush1.msra.mxu0 0.0
    %1090 = vmatprep.subr.mxu0 0.0
    %1091 = vmatpush1.msra.mxu0 0.0
    %1092 = vmatprep.subr.mxu0 0.0
    %1093 = vmatpush1.msra.mxu0 0.0
    %1094 = vmatprep.subr.mxu0 0.0
    %1095 = vmatpush1.msra.mxu0 0.0
    %1096 = vmatprep.subr.mxu0 0.0
    %1097 = vmatpush1.msra.mxu0 0.0
    %1098 = vmatprep.subr.mxu0 0.0
    %1099 = vmatpush1.msra.mxu0 0.0
    %1100 = vmatprep.subr.mxu0 0.0
    %1101 = vmatpush1.msra.mxu0 0.0
    %1102 = vmatprep.subr.mxu0 0.0
    %1103 = vmatpush1.msra.mxu0 0.0
    %1104 = vmatprep.subr.mxu0 0.0
    %1105 = vmatpush1.msra.mxu0 0.0
    %1106 = vmatprep.subr.mxu0 0.0
    %1107 = vmatpush1.msra.mxu0 0.0
    %1108 = vmatprep.subr.mxu0 0.0
    %1109 = vmatpush1.msra.mxu0 0.0
    %1110 = vmatprep.subr.mxu0 0.0
    %1111 = vmatpush1.msra.mxu0 0.0
    %1112 = vmatprep.subr.mxu0 0.0
    %1113 = vmatpush1.msra.mxu0 0.0
    %1114 = vmatprep.subr.mxu0 0.0
    %1115 = vmatpush1.msra.mxu0 0.0
    %1116 = vmatprep.subr.mxu0 0.0
    %1117 = vmatpush1.msra.mxu0 0.0
    %1118 = vmatprep.subr.mxu0 0.0
    %1119 = vmatpush1.msra.mxu0 0.0
    %1120 = vmatprep.mubr.f32.mxu0 0.0
    %1121 = vmatmul.mubr.f32.gmra.mrb[0].mxu0 %v1054
    %v1122 = vpop.f32.mrb[0].mxu0
    %v1123 = vadd.f32 %v341, %v1122
    %v1124 = vpop.f32.mrb[0].mxu0
    %1125 = vdwg.mxu0
    %v1126 = vadd.f32 %v331, %v1123
    %v1127 = vxor.u32 %v1126, 2147483648
    %v1128 = vmul.f32 %v1127, 1.442695
    %v1129 = vpow.pop %v1128
    %v1130 = vadd.f32 %v1129, 1.0
    %v1131 = vrcp.pop %v1130
    %v1132 = vmul.f32 1.0, %v1131
    %1134 = vrot.lane.b32.xlu0 %v1123, 108
    %v1135 = vpop.permute.xlu0 %1134
    %v1137 = vmul.f32 %v1132, %v1135
    %1139 = vrot.lane.b32.xlu0 %v1137, 20
    %v1140 = vpop.permute.xlu0 %1139
    %v1142 = vadd.f32 %v331, %v1140
    %v1143 = vtanh.pop %v1142
    %v1144 = vsub.f32 1.0, %v1132
    %1146 = vrot.lane.b32.xlu0 %v1143, 118
    %v1147 = vpop.permute.xlu0 %1146
    %v1149 = vmul.f32 %v1144, %v1147
    %v1150 = vmul.f32 %v1132, %v1050
    %v1151 = vadd.f32 %v1149, %v1150
    %v1152 = vld [vmem:[%s7] sm:$0xff]
    %v1153 = vld [vmem:[%s7 + $0x8] sm:$0x3]
    %v1154 = vld [vmem:[%s8] sm:$0x1]
    %v1156 = vlaneseq
    %v1157 = vshrl.u32 %v1156, 7
    %v1158 = vsub.s32 0, %v1157
    %v1159 = vrot.slane %v1154, %v1158
    %1162 = vrot.lane.b32.xlu0 %v1151, 118
    %v1163 = vpop.permute.xlu0 %1162
    %v1164 = vsel %vm50, %v1163, 0
    %v1167 = vsel %vm75, %v1153, 0
    %1169 = vmatprep.subr.mxu0 0.0
    %1170 = vmatpush1.msra.mxu0 %v1152
    %1171 = vmatprep.subr.mxu0 0.0
    %1172 = vmatpush1.msra.mxu0 %v1167
    %1173 = vmatprep.subr.mxu0 0.0
    %1174 = vmatpush1.msra.mxu0 0.0
    %1175 = vmatprep.subr.mxu0 0.0
    %1176 = vmatpush1.msra.mxu0 0.0
    %1177 = vmatprep.subr.mxu0 0.0
    %1178 = vmatpush1.msra.mxu0 0.0
    %1179 = vmatprep.subr.mxu0 0.0
    %1180 = vmatpush1.msra.mxu0 0.0
    %1181 = vmatprep.subr.mxu0 0.0
    %1182 = vmatpush1.msra.mxu0 0.0
    %1183 = vmatprep.subr.mxu0 0.0
    %1184 = vmatpush1.msra.mxu0 0.0
    %1185 = vmatprep.subr.mxu0 0.0
    %1186 = vmatpush1.msra.mxu0 0.0
    %1187 = vmatprep.subr.mxu0 0.0
    %1188 = vmatpush1.msra.mxu0 0.0
    %1189 = vmatprep.subr.mxu0 0.0
    %1190 = vmatpush1.msra.mxu0 0.0
    %1191 = vmatprep.subr.mxu0 0.0
    %1192 = vmatpush1.msra.mxu0 0.0
    %1193 = vmatprep.subr.mxu0 0.0
    %1194 = vmatpush1.msra.mxu0 0.0
    %1195 = vmatprep.subr.mxu0 0.0
    %1196 = vmatpush1.msra.mxu0 0.0
    %1197 = vmatprep.subr.mxu0 0.0
    %1198 = vmatpush1.msra.mxu0 0.0
    %1199 = vmatprep.subr.mxu0 0.0
    %1200 = vmatpush1.msra.mxu0 0.0
    %1201 = vmatprep.subr.mxu0 0.0
    %1202 = vmatpush1.msra.mxu0 0.0
    %1203 = vmatprep.subr.mxu0 0.0
    %1204 = vmatpush1.msra.mxu0 0.0
    %1205 = vmatprep.subr.mxu0 0.0
    %1206 = vmatpush1.msra.mxu0 0.0
    %1207 = vmatprep.subr.mxu0 0.0
    %1208 = vmatpush1.msra.mxu0 0.0
    %1209 = vmatprep.subr.mxu0 0.0
    %1210 = vmatpush1.msra.mxu0 0.0
    %1211 = vmatprep.subr.mxu0 0.0
    %1212 = vmatpush1.msra.mxu0 0.0
    %1213 = vmatprep.subr.mxu0 0.0
    %1214 = vmatpush1.msra.mxu0 0.0
    %1215 = vmatprep.subr.mxu0 0.0
    %1216 = vmatpush1.msra.mxu0 0.0
    %1217 = vmatprep.subr.mxu0 0.0
    %1218 = vmatpush1.msra.mxu0 0.0
    %1219 = vmatprep.subr.mxu0 0.0
    %1220 = vmatpush1.msra.mxu0 0.0
    %1221 = vmatprep.subr.mxu0 0.0
    %1222 = vmatpush1.msra.mxu0 0.0
    %1223 = vmatprep.subr.mxu0 0.0
    %1224 = vmatpush1.msra.mxu0 0.0
    %1225 = vmatprep.subr.mxu0 0.0
    %1226 = vmatpush1.msra.mxu0 0.0
    %1227 = vmatprep.subr.mxu0 0.0
    %1228 = vmatpush1.msra.mxu0 0.0
    %1229 = vmatprep.subr.mxu0 0.0
    %1230 = vmatpush1.msra.mxu0 0.0
    %1231 = vmatprep.subr.mxu0 0.0
    %1232 = vmatpush1.msra.mxu0 0.0
    %1233 = vmatprep.mubr.f32.mxu0 0.0
    %1234 = vmatmul.mubr.f32.gmra.mrb[0].mxu0 %v448
    %v1235 = vpop.f32.mrb[0].mxu0
    %v1236 = vadd.f32 %v1159, %v1235
    %v1237 = vpop.f32.mrb[0].mxu0
    %1238 = vmatprep.mubr.f32.mxu0 0.0
    %1239 = vmatmul.mubr.f32.gmra.mrb[0].mxu0 %v549
    %v1240 = vpop.f32.mrb[0].mxu0
    %v1241 = vadd.f32 %v1159, %v1240
    %v1242 = vpop.f32.mrb[0].mxu0
    %1243 = vmatprep.mubr.f32.mxu0 0.0
    %1244 = vmatmul.mubr.f32.gmra.mrb[0].mxu0 %v650
    %v1245 = vpop.f32.mrb[0].mxu0
    %v1246 = vadd.f32 %v1159, %v1245
    %v1247 = vpop.f32.mrb[0].mxu0
    %1248 = vmatprep.mubr.f32.mxu0 0.0
    %1249 = vmatmul.mubr.f32.gmra.mrb[0].mxu0 %v751
    %v1250 = vpop.f32.mrb[0].mxu0
    %v1251 = vadd.f32 %v1159, %v1250
    %v1252 = vpop.f32.mrb[0].mxu0
    %1253 = vmatprep.mubr.f32.mxu0 0.0
    %1254 = vmatmul.mubr.f32.gmra.mrb[0].mxu0 %v852
    %v1255 = vpop.f32.mrb[0].mxu0
    %v1256 = vadd.f32 %v1159, %v1255
    %v1257 = vpop.f32.mrb[0].mxu0
    %1258 = vmatprep.mubr.f32.mxu0 0.0
    %1259 = vmatmul.mubr.f32.gmra.mrb[0].mxu0 %v953
    %v1260 = vpop.f32.mrb[0].mxu0
    %v1261 = vadd.f32 %v1159, %v1260
    %v1262 = vpop.f32.mrb[0].mxu0
    %1263 = vmatprep.mubr.f32.mxu0 0.0
    %1264 = vmatmul.mubr.f32.gmra.mrb[0].mxu0 %v1054
    %v1265 = vpop.f32.mrb[0].mxu0
    %v1266 = vadd.f32 %v1159, %v1265
    %v1267 = vpop.f32.mrb[0].mxu0
    %1268 = vmatprep.mubr.f32.mxu0 0.0
    %1269 = vmatmul.mubr.f32.gmra.mrb[0].mxu0 %v1164
    %v1270 = vpop.f32.mrb[0].mxu0
    %v1271 = vadd.f32 %v1159, %v1270
    %v1272 = vpop.f32.mrb[0].mxu0
    %1273 = vdwg.mxu0
    %1274 = vst [vmem:[#allocation2] sm:$0xff] %v1236
    %1275 = vst [vmem:[#allocation2 + $0x8] sm:$0xff] %v1241
    %1276 = vst [vmem:[#allocation2 + $0x10] sm:$0xff] %v1246
    %1277 = vst [vmem:[#allocation2 + $0x18] sm:$0xff] %v1251
    %1278 = vst [vmem:[#allocation2 + $0x20] sm:$0xff] %v1256
    %1279 = vst [vmem:[#allocation2 + $0x28] sm:$0xff] %v1261
    %1280 = vst [vmem:[#allocation2 + $0x30] sm:$0xff] %v1266
    %1281 = vst [vmem:[#allocation2 + $0x38] sm:$0xff] %v1271
    // Predicated region
    $region38: #{tpu_custom_call.1} parent=1 // pred_check
      _
    $region39: #{tpu_custom_call.1} parent=1 // pred_check_branch
      %1283 = sbr.rel (0) target = $region41
    $region40: #{tpu_custom_call.1} parent=1 // pred_region
      %s1285 = ssub.s32 1024, 1024
      %1286 = vsyncadd [#allocation3], %s1285
      %s1287 = sshll.u32 [#allocation2], 4
      %s1288 = int_to_ptr.vmem [resolvable:$true] %s1287
      %1293 = dma.vmem_to_hbm [thread:$0]  %s1288, 1024, %s9, [#allocation3], 128, 128, 8
    $region41: #{tpu_custom_call.1} parent=1 // pred_fallthru
      _
    // Predicated region
    $region42: #{tpu_custom_call.1} parent=1 // pred_check
      _
    $region43: #{tpu_custom_call.1} parent=1 // pred_check_branch
      %1295 = sbr.rel (0) target = $region45
    $region44: #{tpu_custom_call.1} parent=1 // pred_region
      %1296 = dma.done [#allocation3], 1024
    $region45: #{tpu_custom_call.1} parent=1 // pred_fallthru
      _
    %1297 = vsyncpa [#allocation3], 1

</llo_original>
